<compile_context>
chip_gen: v7x
topology: tpu7x:2x2x1
jax: 0.10.0
libtpu: 0.0.40
codegen_flags: <defaults>
</compile_context>

<pallas_src>
import functools
import math

import jax
import jax.numpy as jnp
from jax import lax
from jax.experimental import pallas as pl
from jax.experimental.pallas import tpu as pltpu


def _round_up(x, m):
    return ((x + m - 1) // m) * m


def _pick_bt(n_total, bt_max=128):
    """Largest multiple-of-8 batch tile <= bt_max that still leaves >= 2 grid
    blocks (keeps both v7x TensorCores busy under the 'parallel' axis)."""
    bt = min(bt_max, max(8, _round_up(n_total, 8)))
    while bt > 8 and -(-n_total // bt) < 2:
        bt //= 2
    return bt


# ----------------------------------------------------------------------------
# Encoder kernel: one grid step = `bt` sequences, emits only their CLS rows.
# ----------------------------------------------------------------------------
def _encoder_cls_kernel(x_ref, bias_ref, ln_ref, wq_ref, wkv_ref, bh_ref,
                        bkv_ref, wo_ref, w1_ref, b1_ref, w2_ref, o_ref,
                        *, scale):
    bt, S, H = x_ref.shape
    ln = ln_ref[...]          # (6, H) f32: rows = [g0, b0, g1, b1, g2, b2]
    bh = bh_ref[...]          # (3, H) f32: rows = [bq, bo, b_ffn2]

    def layer_norm(h, g, b):
        mu = jnp.mean(h, axis=-1, keepdims=True)
        var = jnp.mean((h - mu) ** 2, axis=-1, keepdims=True)
        return (h - mu) * lax.rsqrt(var + 1e-12) * g + b

    # --- embedding LayerNorm over ALL positions (CLS attends to every row) ---
    # x arrives bf16 (halved HBM stream); all LN / softmax math stays f32.
    x_all = x_ref[...].astype(jnp.float32).reshape(bt * S, H)
    h_all = layer_norm(x_all, ln[0:1, :], ln[1:2, :])                  # (bt*S, H)
    h_cls = h_all.reshape(bt, S, H)[:, 0, :]                           # (bt, H)

    # --- fused K/V projection: bf16 operands on the MXU, f32 accumulate ---
    kv = jnp.dot(h_all.astype(jnp.bfloat16), wkv_ref[...],
                 preferred_element_type=jnp.float32) + bkv_ref[...]    # (bt*S, 2H)
    k = kv[:, :H].reshape(bt, S, H)
    v = kv[:, H:].reshape(bt, S, H)

    # --- CLS-only query projection (M=bt matmul on the MXU) ---
    q = jnp.dot(h_cls.astype(jnp.bfloat16), wq_ref[...],
                preferred_element_type=jnp.float32) + bh[0:1, :]       # (bt, H)

    # --- tiny attention contractions on VPU/XLU (M=1 matmuls starve the MXU) ---
    scores = jnp.sum(q[:, None, :] * k, axis=-1) * scale + bias_ref[...]  # (bt, S)
    m = jnp.max(scores, axis=-1, keepdims=True)
    e = jnp.exp(scores - m)
    denom = jnp.sum(e, axis=-1, keepdims=True)                         # (bt, 1)
    ctx = jnp.sum(e[:, :, None] * v, axis=1)                           # (bt, H)
    # fold the softmax divide into the context scaling (EUP approx reciprocal)
    ctx = ctx * pl.reciprocal(denom, approx=True)

    attn_out = jnp.dot(ctx.astype(jnp.bfloat16), wo_ref[...],
                       preferred_element_type=jnp.float32) + bh[1:2, :]
    h1 = layer_norm(h_cls + attn_out, ln[2:3, :], ln[3:4, :])          # (bt, H)

    f = jnp.dot(h1.astype(jnp.bfloat16), w1_ref[...],
                preferred_element_type=jnp.float32) + b1_ref[...]      # (bt, F)
    # TODO(synk): BERT uses exact erf-GELU; tanh approximation kept (EUP path).
    f = jax.nn.gelu(f, approximate=True)
    f = jnp.dot(f.astype(jnp.bfloat16), w2_ref[...],
                preferred_element_type=jnp.float32) + bh[2:3, :]       # (bt, H)
    h2 = layer_norm(h1 + f, ln[4:5, :], ln[5:6, :])

    o_ref[...] = h2                                                    # dense (bt, H)


def _encode_cls(ids, pad_id, p):
    """ids: (N, S) int32 -> CLS embeddings (N, H) f32, one fused launch."""
    N, S = ids.shape
    H = p['wq'].shape[0]
    F = p['w1'].shape[1]

    bt = _pick_bt(N)
    n_total = _round_up(N, bt)
    if n_total != N:
        ids = jnp.concatenate(
            [ids, jnp.zeros((n_total - N, S), ids.dtype)], axis=0)

    mask = (ids != pad_id).astype(jnp.float32)                         # (n_total, S)
    bias = (mask - 1.0) * 1e9                                          # 0 / -1e9, 2-D
    x = (jnp.take(p['tok_emb'], ids, axis=0)
         + p['pos_emb'][None, :S, :]).astype(jnp.bfloat16)             # bf16 DMA

    xmap = lambda i: (i, 0, 0)
    rmap = lambda i: (i, 0)
    wmap = lambda i: (0, 0)
    # TODO(synk): at real BERT sizes (H=768, F=3072) mark the stationary weight
    # specs pipeline_mode=pl.Buffered(1) to avoid double-buffering ~14 MiB.

    out = pl.pallas_call(
        functools.partial(_encoder_cls_kernel, scale=1.0 / math.sqrt(H)),
        out_shape=jax.ShapeDtypeStruct((n_total, H), jnp.float32),
        grid=(n_total // bt,),
        in_specs=[
            pl.BlockSpec((bt, S, H), xmap),        # x (bf16)
            pl.BlockSpec((bt, S), rmap),           # additive attention bias (2-D)
            pl.BlockSpec((6, H), wmap),            # packed LN gammas/betas
            pl.BlockSpec((H, H), wmap),            # wq       (bf16)
            pl.BlockSpec((H, 2 * H), wmap),        # wkv fused (bf16)
            pl.BlockSpec((3, H), wmap),            # packed biases [bq, bo, b2]
            pl.BlockSpec((1, 2 * H), wmap),        # bkv
            pl.BlockSpec((H, H), wmap),            # wo       (bf16)
            pl.BlockSpec((H, F), wmap),            # w1       (bf16)
            pl.BlockSpec((1, F), wmap),            # b1
            pl.BlockSpec((F, H), wmap),            # w2       (bf16)
        ],
        out_specs=pl.BlockSpec((bt, H), rmap),
        compiler_params=pltpu.CompilerParams(
            dimension_semantics=("parallel",)),    # batch blocks are independent
    )(x, bias, p['ln'], p['wq'], p['wkv'], p['bias_h'], p['bkv'],
      p['wo'], p['w1'], p['b1'], p['w2'])
    return out[:N]


# ----------------------------------------------------------------------------
# Cosine similarity (plain JAX; torch semantics: clamp each norm with eps).
# ----------------------------------------------------------------------------
def _cosine(a, b, eps=1e-8):
    num = jnp.sum(a * b, axis=-1)
    na = jnp.maximum(jnp.sqrt(jnp.sum(a * a, axis=-1)), eps)
    nb = jnp.maximum(jnp.sqrt(jnp.sum(b * b, axis=-1)), eps)
    return num / (na * nb)


# ----------------------------------------------------------------------------
# MatchSum forward
# ----------------------------------------------------------------------------
@jax.jit
def matchsum_forward(text_id, candidate_id, summary_id, params):
    B, S = text_id.shape
    C = candidate_id.shape[1]

    # pad_id = 0 unless the first token is 0 (RoBERTa convention) -> pad_id = 1
    pad_id = jnp.where(text_id[0, 0] == 0, 1, 0)

    # one fused encoder launch over doc + summary + candidates
    all_ids = jnp.concatenate(
        [text_id, summary_id, candidate_id.reshape(B * C, S)], axis=0)
    cls = _encode_cls(all_ids, pad_id, params)                         # (2B+BC, H)

    doc_emb = cls[:B]
    summary_emb = cls[B:2 * B]
    cand_emb = cls[2 * B:].reshape(B, C, -1)

    summary_score = _cosine(summary_emb, doc_emb)                      # (B,)
    score = _cosine(cand_emb, doc_emb[:, None, :])                     # (B, C)
    return {'score': score, 'summary_score': summary_score}


# ----------------------------------------------------------------------------
# Deterministic synthetic parameters (weights stored in bf16 for the MXU).
# ----------------------------------------------------------------------------
def init_params(key, vocab, seq, hidden, ffn):
    ks = jax.random.split(key, 8)
    std = 0.02

    def w(k, shape):
        return (std * jax.random.normal(k, shape, jnp.float32)).astype(jnp.bfloat16)

    ones = jnp.ones((1, hidden), jnp.float32)
    zeros = jnp.zeros((1, hidden), jnp.float32)
    return {
        'tok_emb': std * jax.random.normal(ks[0], (vocab, hidden), jnp.float32),
        'pos_emb': std * jax.random.normal(ks[1], (seq, hidden), jnp.float32),
        'ln': jnp.concatenate([ones, zeros, ones, zeros, ones, zeros], axis=0),
        'wq': w(ks[2], (hidden, hidden)),
        'wkv': w(ks[3], (hidden, 2 * hidden)),        # fused K/V projection
        'wo': w(ks[4], (hidden, hidden)),
        'w1': w(ks[5], (hidden, ffn)),
        'w2': w(ks[6], (ffn, hidden)),
        'bias_h': jnp.zeros((3, hidden), jnp.float32),   # [bq, bo, b_ffn2]
        'bkv': jnp.zeros((1, 2 * hidden), jnp.float32),
        'b1': jnp.zeros((1, ffn), jnp.float32),
    }


if __name__ == "__main__":
    B, C, S = 2, 4, 8              # batch, candidate_num, seq_len
    HIDDEN, FFN, VOCAB = 128, 256, 100   # H=128 keeps every vreg lane-dense

    key = jax.random.PRNGKey(0)
    k_txt, k_cand, k_sum, k_par = jax.random.split(key, 4)

    text_id = jax.random.randint(k_txt, (B, S), 2, VOCAB, dtype=jnp.int32)
    candidate_id = jax.random.randint(k_cand, (B, C, S), 2, VOCAB, dtype=jnp.int32)
    summary_id = jax.random.randint(k_sum, (B, S), 2, VOCAB, dtype=jnp.int32)

    # add some padding (pad_id = 0) at the tail to exercise the attention mask
    text_id = text_id.at[:, -2:].set(0)
    summary_id = summary_id.at[:, -2:].set(0)
    candidate_id = candidate_id.at[:, :, -1:].set(0)

    params = init_params(k_par, VOCAB, S, HIDDEN, FFN)

    out = matchsum_forward(text_id, candidate_id, summary_id, params)
    jax.block_until_ready(out)

    assert out['score'].shape == (B, C)
    assert out['summary_score'].shape == (B,)
    assert bool(jnp.all(jnp.isfinite(out['score'])))
    assert bool(jnp.all(jnp.isfinite(out['summary_score'])))
    print("KERNEL_OK")
</pallas_src>

<mosaic_0001>
module attributes {stable_mosaic.version = 11 : i64} {
  func.func @_encoder_cls_kernel(%arg0: i32, %arg1: memref<8x8x128xbf16, #tpu.memory_space<vmem>>, %arg2: memref<8x8xf32, #tpu.memory_space<vmem>>, %arg3: memref<6x128xf32, #tpu.memory_space<vmem>>, %arg4: memref<128x128xbf16, #tpu.memory_space<vmem>>, %arg5: memref<128x256xbf16, #tpu.memory_space<vmem>>, %arg6: memref<3x128xf32, #tpu.memory_space<vmem>>, %arg7: memref<1x256xf32, #tpu.memory_space<vmem>>, %arg8: memref<128x128xbf16, #tpu.memory_space<vmem>>, %arg9: memref<128x256xbf16, #tpu.memory_space<vmem>>, %arg10: memref<1x256xf32, #tpu.memory_space<vmem>>, %arg11: memref<256x128xbf16, #tpu.memory_space<vmem>>, %arg12: memref<8x128xf32, #tpu.memory_space<vmem>>) attributes {dimension_semantics = [#tpu.dimension_semantics<parallel>], iteration_bounds = array<i64: 2>, scalar_prefetch = 0 : i64, scratch_operands = 0 : i64, tpu.core_type = #tpu.core_type<tc>, window_params = [{transform_indices = @transform_0, window_bounds = array<i64: 8, 8, 128>}, {transform_indices = @transform_1, window_bounds = array<i64: 8, 8>}, {pipeline_mode = #tpu.pipeline_mode<synchronous>, transform_indices = @transform_2, window_bounds = array<i64: 6, 128>}, {pipeline_mode = #tpu.pipeline_mode<synchronous>, transform_indices = @transform_3, window_bounds = array<i64: 128, 128>}, {pipeline_mode = #tpu.pipeline_mode<synchronous>, transform_indices = @transform_4, window_bounds = array<i64: 128, 256>}, {pipeline_mode = #tpu.pipeline_mode<synchronous>, transform_indices = @transform_5, window_bounds = array<i64: 3, 128>}, {pipeline_mode = #tpu.pipeline_mode<synchronous>, transform_indices = @transform_6, window_bounds = array<i64: 1, 256>}, {pipeline_mode = #tpu.pipeline_mode<synchronous>, transform_indices = @transform_7, window_bounds = array<i64: 128, 128>}, {pipeline_mode = #tpu.pipeline_mode<synchronous>, transform_indices = @transform_8, window_bounds = array<i64: 128, 256>}, {pipeline_mode = #tpu.pipeline_mode<synchronous>, transform_indices = @transform_9, window_bounds = array<i64: 1, 256>}, {pipeline_mode = #tpu.pipeline_mode<synchronous>, transform_indices = @transform_10, window_bounds = array<i64: 256, 128>}, {transform_indices = @transform_11, window_bounds = array<i64: 8, 128>}]} {
    %c0 = arith.constant 0 : index
    %c0_0 = arith.constant 0 : index
    %0 = vector.load %arg3[%c0, %c0_0] : memref<6x128xf32, #tpu.memory_space<vmem>>, vector<6x128xf32>
    %c0_1 = arith.constant 0 : index
    %c0_2 = arith.constant 0 : index
    %1 = vector.load %arg6[%c0_1, %c0_2] : memref<3x128xf32, #tpu.memory_space<vmem>>, vector<3x128xf32>
    %c0_3 = arith.constant 0 : index
    %c0_4 = arith.constant 0 : index
    %c0_5 = arith.constant 0 : index
    %2 = vector.load %arg1[%c0_3, %c0_4, %c0_5] : memref<8x8x128xbf16, #tpu.memory_space<vmem>>, vector<8x8x128xbf16>
    %3 = arith.extf %2 : vector<8x8x128xbf16> to vector<8x8x128xf32>
    %4 = vector.shape_cast %3 : vector<8x8x128xf32> to vector<64x128xf32>
    %5 = vector.extract_strided_slice %0 {offsets = [0, 0], sizes = [1, 128], strides = [1, 1]} : vector<6x128xf32> to vector<1x128xf32>
    %6 = vector.extract_strided_slice %0 {offsets = [1, 0], sizes = [1, 128], strides = [1, 1]} : vector<6x128xf32> to vector<1x128xf32>
    %cst = arith.constant dense<0.000000e+00> : vector<64xf32>
    %7 = vector.multi_reduction <add>, %4, %cst [1] : vector<64x128xf32> to vector<64xf32>
    %8 = vector.shape_cast %7 : vector<64xf32> to vector<64x1xf32>
    %cst_6 = arith.constant 1.280000e+02 : f32
    %9 = vector.broadcast %cst_6 : f32 to vector<64x1xf32>
    %10 = arith.divf %8, %9 : vector<64x1xf32>
    %11 = vector.broadcast %10 : vector<64x1xf32> to vector<64x128xf32>
    %12 = arith.subf %4, %11 : vector<64x128xf32>
    %13 = arith.mulf %12, %12 : vector<64x128xf32>
    %cst_7 = arith.constant dense<0.000000e+00> : vector<64xf32>
    %14 = vector.multi_reduction <add>, %13, %cst_7 [1] : vector<64x128xf32> to vector<64xf32>
    %15 = vector.shape_cast %14 : vector<64xf32> to vector<64x1xf32>
    %cst_8 = arith.constant 1.280000e+02 : f32
    %16 = vector.broadcast %cst_8 : f32 to vector<64x1xf32>
    %17 = arith.divf %15, %16 : vector<64x1xf32>
    %18 = vector.broadcast %10 : vector<64x1xf32> to vector<64x128xf32>
    %19 = arith.subf %4, %18 : vector<64x128xf32>
    %cst_9 = arith.constant 9.99999996E-13 : f32
    %20 = vector.broadcast %cst_9 : f32 to vector<64x1xf32>
    %21 = arith.addf %17, %20 : vector<64x1xf32>
    %22 = math.rsqrt %21 : vector<64x1xf32>
    %23 = vector.broadcast %22 : vector<64x1xf32> to vector<64x128xf32>
    %24 = arith.mulf %19, %23 : vector<64x128xf32>
    %25 = vector.broadcast %5 : vector<1x128xf32> to vector<64x128xf32>
    %26 = arith.mulf %24, %25 : vector<64x128xf32>
    %27 = vector.broadcast %6 : vector<1x128xf32> to vector<64x128xf32>
    %28 = arith.addf %26, %27 : vector<64x128xf32>
    %29 = vector.shape_cast %28 : vector<64x128xf32> to vector<8x8x128xf32>
    %30 = vector.extract_strided_slice %29 {offsets = [0, 0, 0], sizes = [8, 1, 128], strides = [1, 1, 1]} : vector<8x8x128xf32> to vector<8x1x128xf32>
    %31 = vector.shape_cast %30 : vector<8x1x128xf32> to vector<8x128xf32>
    %32 = arith.truncf %28 : vector<64x128xf32> to vector<64x128xbf16>
    %c0_10 = arith.constant 0 : index
    %c0_11 = arith.constant 0 : index
    %33 = vector.load %arg5[%c0_10, %c0_11] : memref<128x256xbf16, #tpu.memory_space<vmem>>, vector<128x256xbf16>
    %cst_12 = arith.constant dense<0.000000e+00> : vector<64x256xf32>
    %34 = tpu.matmul %32, %33, %cst_12 {dimension_numbers = #tpu.dot_dimension_numbers<[1], [0], [0], [1], [0, 0, 1, 1], [], []>} : vector<64x128xbf16>, vector<128x256xbf16>, vector<64x256xf32> -> vector<64x256xf32>
    %c0_13 = arith.constant 0 : index
    %c0_14 = arith.constant 0 : index
    %35 = vector.load %arg7[%c0_13, %c0_14] : memref<1x256xf32, #tpu.memory_space<vmem>>, vector<1x256xf32>
    %36 = vector.broadcast %35 : vector<1x256xf32> to vector<64x256xf32>
    %37 = arith.addf %34, %36 : vector<64x256xf32>
    %38 = vector.extract_strided_slice %37 {offsets = [0, 0], sizes = [64, 128], strides = [1, 1]} : vector<64x256xf32> to vector<64x128xf32>
    %39 = vector.shape_cast %38 : vector<64x128xf32> to vector<8x8x128xf32>
    %40 = vector.extract_strided_slice %37 {offsets = [0, 128], sizes = [64, 128], strides = [1, 1]} : vector<64x256xf32> to vector<64x128xf32>
    %41 = vector.shape_cast %40 : vector<64x128xf32> to vector<8x8x128xf32>
    %42 = arith.truncf %31 : vector<8x128xf32> to vector<8x128xbf16>
    %c0_15 = arith.constant 0 : index
    %c0_16 = arith.constant 0 : index
    %43 = vector.load %arg4[%c0_15, %c0_16] : memref<128x128xbf16, #tpu.memory_space<vmem>>, vector<128x128xbf16>
    %cst_17 = arith.constant dense<0.000000e+00> : vector<8x128xf32>
    %44 = tpu.matmul %42, %43, %cst_17 {dimension_numbers = #tpu.dot_dimension_numbers<[1], [0], [0], [1], [0, 0, 1, 1], [], []>} : vector<8x128xbf16>, vector<128x128xbf16>, vector<8x128xf32> -> vector<8x128xf32>
    %45 = vector.extract_strided_slice %1 {offsets = [0, 0], sizes = [1, 128], strides = [1, 1]} : vector<3x128xf32> to vector<1x128xf32>
    %46 = vector.broadcast %45 : vector<1x128xf32> to vector<8x128xf32>
    %47 = arith.addf %44, %46 : vector<8x128xf32>
    %48 = vector.shape_cast %47 : vector<8x128xf32> to vector<8x1x128xf32>
    %49 = vector.broadcast %48 : vector<8x1x128xf32> to vector<8x8x128xf32>
    %50 = arith.mulf %49, %39 : vector<8x8x128xf32>
    %cst_18 = arith.constant dense<0.000000e+00> : vector<8x8xf32>
    %51 = vector.multi_reduction <add>, %50, %cst_18 [2] : vector<8x8x128xf32> to vector<8x8xf32>
    %cst_19 = arith.constant 0.0883883461 : f32
    %52 = vector.broadcast %cst_19 : f32 to vector<8x8xf32>
    %53 = arith.mulf %51, %52 : vector<8x8xf32>
    %c0_20 = arith.constant 0 : index
    %c0_21 = arith.constant 0 : index
    %54 = vector.load %arg2[%c0_20, %c0_21] : memref<8x8xf32, #tpu.memory_space<vmem>>, vector<8x8xf32>
    %55 = arith.addf %53, %54 : vector<8x8xf32>
    %cst_22 = arith.constant dense<0xFF800000> : vector<8xf32>
    %56 = vector.multi_reduction <maximumf>, %55, %cst_22 [1] : vector<8x8xf32> to vector<8xf32>
    %57 = vector.shape_cast %56 : vector<8xf32> to vector<8x1xf32>
    %58 = vector.broadcast %57 : vector<8x1xf32> to vector<8x8xf32>
    %59 = arith.subf %55, %58 : vector<8x8xf32>
    %60 = math.exp %59 : vector<8x8xf32>
    %cst_23 = arith.constant dense<0.000000e+00> : vector<8xf32>
    %61 = vector.multi_reduction <add>, %60, %cst_23 [1] : vector<8x8xf32> to vector<8xf32>
    %62 = vector.shape_cast %61 : vector<8xf32> to vector<8x1xf32>
    %63 = vector.shape_cast %60 : vector<8x8xf32> to vector<8x8x1xf32>
    %64 = vector.broadcast %63 : vector<8x8x1xf32> to vector<8x8x128xf32>
    %65 = arith.mulf %64, %41 : vector<8x8x128xf32>
    %cst_24 = arith.constant dense<0.000000e+00> : vector<8x128xf32>
    %66 = vector.multi_reduction <add>, %65, %cst_24 [1] : vector<8x8x128xf32> to vector<8x128xf32>
    %67 = tpu.reciprocal %62 {approx = true} : vector<8x1xf32> -> vector<8x1xf32>
    %68 = vector.broadcast %67 : vector<8x1xf32> to vector<8x128xf32>
    %69 = arith.mulf %66, %68 : vector<8x128xf32>
    %70 = arith.truncf %69 : vector<8x128xf32> to vector<8x128xbf16>
    %c0_25 = arith.constant 0 : index
    %c0_26 = arith.constant 0 : index
    %71 = vector.load %arg8[%c0_25, %c0_26] : memref<128x128xbf16, #tpu.memory_space<vmem>>, vector<128x128xbf16>
    %cst_27 = arith.constant dense<0.000000e+00> : vector<8x128xf32>
    %72 = tpu.matmul %70, %71, %cst_27 {dimension_numbers = #tpu.dot_dimension_numbers<[1], [0], [0], [1], [0, 0, 1, 1], [], []>} : vector<8x128xbf16>, vector<128x128xbf16>, vector<8x128xf32> -> vector<8x128xf32>
    %73 = vector.extract_strided_slice %1 {offsets = [1, 0], sizes = [1, 128], strides = [1, 1]} : vector<3x128xf32> to vector<1x128xf32>
    %74 = vector.broadcast %73 : vector<1x128xf32> to vector<8x128xf32>
    %75 = arith.addf %72, %74 : vector<8x128xf32>
    %76 = arith.addf %31, %75 : vector<8x128xf32>
    %77 = vector.extract_strided_slice %0 {offsets = [2, 0], sizes = [1, 128], strides = [1, 1]} : vector<6x128xf32> to vector<1x128xf32>
    %78 = vector.extract_strided_slice %0 {offsets = [3, 0], sizes = [1, 128], strides = [1, 1]} : vector<6x128xf32> to vector<1x128xf32>
    %cst_28 = arith.constant dense<0.000000e+00> : vector<8xf32>
    %79 = vector.multi_reduction <add>, %76, %cst_28 [1] : vector<8x128xf32> to vector<8xf32>
    %80 = vector.shape_cast %79 : vector<8xf32> to vector<8x1xf32>
    %cst_29 = arith.constant 1.280000e+02 : f32
    %81 = vector.broadcast %cst_29 : f32 to vector<8x1xf32>
    %82 = arith.divf %80, %81 : vector<8x1xf32>
    %83 = vector.broadcast %82 : vector<8x1xf32> to vector<8x128xf32>
    %84 = arith.subf %76, %83 : vector<8x128xf32>
    %85 = arith.mulf %84, %84 : vector<8x128xf32>
    %cst_30 = arith.constant dense<0.000000e+00> : vector<8xf32>
    %86 = vector.multi_reduction <add>, %85, %cst_30 [1] : vector<8x128xf32> to vector<8xf32>
    %87 = vector.shape_cast %86 : vector<8xf32> to vector<8x1xf32>
    %cst_31 = arith.constant 1.280000e+02 : f32
    %88 = vector.broadcast %cst_31 : f32 to vector<8x1xf32>
    %89 = arith.divf %87, %88 : vector<8x1xf32>
    %90 = vector.broadcast %82 : vector<8x1xf32> to vector<8x128xf32>
    %91 = arith.subf %76, %90 : vector<8x128xf32>
    %cst_32 = arith.constant 9.99999996E-13 : f32
    %92 = vector.broadcast %cst_32 : f32 to vector<8x1xf32>
    %93 = arith.addf %89, %92 : vector<8x1xf32>
    %94 = math.rsqrt %93 : vector<8x1xf32>
    %95 = vector.broadcast %94 : vector<8x1xf32> to vector<8x128xf32>
    %96 = arith.mulf %91, %95 : vector<8x128xf32>
    %97 = vector.broadcast %77 : vector<1x128xf32> to vector<8x128xf32>
    %98 = arith.mulf %96, %97 : vector<8x128xf32>
    %99 = vector.broadcast %78 : vector<1x128xf32> to vector<8x128xf32>
    %100 = arith.addf %98, %99 : vector<8x128xf32>
    %101 = arith.truncf %100 : vector<8x128xf32> to vector<8x128xbf16>
    %c0_33 = arith.constant 0 : index
    %c0_34 = arith.constant 0 : index
    %102 = vector.load %arg9[%c0_33, %c0_34] : memref<128x256xbf16, #tpu.memory_space<vmem>>, vector<128x256xbf16>
    %cst_35 = arith.constant dense<0.000000e+00> : vector<8x256xf32>
    %103 = tpu.matmul %101, %102, %cst_35 {dimension_numbers = #tpu.dot_dimension_numbers<[1], [0], [0], [1], [0, 0, 1, 1], [], []>} : vector<8x128xbf16>, vector<128x256xbf16>, vector<8x256xf32> -> vector<8x256xf32>
    %c0_36 = arith.constant 0 : index
    %c0_37 = arith.constant 0 : index
    %104 = vector.load %arg10[%c0_36, %c0_37] : memref<1x256xf32, #tpu.memory_space<vmem>>, vector<1x256xf32>
    %105 = vector.broadcast %104 : vector<1x256xf32> to vector<8x256xf32>
    %106 = arith.addf %103, %105 : vector<8x256xf32>
    %107 = arith.mulf %106, %106 : vector<8x256xf32>
    %108 = arith.mulf %106, %107 : vector<8x256xf32>
    %cst_38 = arith.constant 4.471500e-02 : f32
    %109 = vector.broadcast %cst_38 : f32 to vector<8x256xf32>
    %110 = arith.mulf %109, %108 : vector<8x256xf32>
    %111 = arith.addf %106, %110 : vector<8x256xf32>
    %cst_39 = arith.constant 0.797884583 : f32
    %112 = vector.broadcast %cst_39 : f32 to vector<8x256xf32>
    %113 = arith.mulf %112, %111 : vector<8x256xf32>
    %114 = math.tanh %113 : vector<8x256xf32>
    %cst_40 = arith.constant 1.000000e+00 : f32
    %115 = vector.broadcast %cst_40 : f32 to vector<8x256xf32>
    %116 = arith.addf %115, %114 : vector<8x256xf32>
    %cst_41 = arith.constant 5.000000e-01 : f32
    %117 = vector.broadcast %cst_41 : f32 to vector<8x256xf32>
    %118 = arith.mulf %117, %116 : vector<8x256xf32>
    %119 = arith.mulf %106, %118 : vector<8x256xf32>
    %120 = arith.truncf %119 : vector<8x256xf32> to vector<8x256xbf16>
    %c0_42 = arith.constant 0 : index
    %c0_43 = arith.constant 0 : index
    %121 = vector.load %arg11[%c0_42, %c0_43] : memref<256x128xbf16, #tpu.memory_space<vmem>>, vector<256x128xbf16>
    %cst_44 = arith.constant dense<0.000000e+00> : vector<8x128xf32>
    %122 = tpu.matmul %120, %121, %cst_44 {dimension_numbers = #tpu.dot_dimension_numbers<[1], [0], [0], [1], [0, 0, 1, 1], [], []>} : vector<8x256xbf16>, vector<256x128xbf16>, vector<8x128xf32> -> vector<8x128xf32>
    %123 = vector.extract_strided_slice %1 {offsets = [2, 0], sizes = [1, 128], strides = [1, 1]} : vector<3x128xf32> to vector<1x128xf32>
    %124 = vector.broadcast %123 : vector<1x128xf32> to vector<8x128xf32>
    %125 = arith.addf %122, %124 : vector<8x128xf32>
    %126 = arith.addf %100, %125 : vector<8x128xf32>
    %127 = vector.extract_strided_slice %0 {offsets = [4, 0], sizes = [1, 128], strides = [1, 1]} : vector<6x128xf32> to vector<1x128xf32>
    %128 = vector.extract_strided_slice %0 {offsets = [5, 0], sizes = [1, 128], strides = [1, 1]} : vector<6x128xf32> to vector<1x128xf32>
    %cst_45 = arith.constant dense<0.000000e+00> : vector<8xf32>
    %129 = vector.multi_reduction <add>, %126, %cst_45 [1] : vector<8x128xf32> to vector<8xf32>
    %130 = vector.shape_cast %129 : vector<8xf32> to vector<8x1xf32>
    %cst_46 = arith.constant 1.280000e+02 : f32
    %131 = vector.broadcast %cst_46 : f32 to vector<8x1xf32>
    %132 = arith.divf %130, %131 : vector<8x1xf32>
    %133 = vector.broadcast %132 : vector<8x1xf32> to vector<8x128xf32>
    %134 = arith.subf %126, %133 : vector<8x128xf32>
    %135 = arith.mulf %134, %134 : vector<8x128xf32>
    %cst_47 = arith.constant dense<0.000000e+00> : vector<8xf32>
    %136 = vector.multi_reduction <add>, %135, %cst_47 [1] : vector<8x128xf32> to vector<8xf32>
    %137 = vector.shape_cast %136 : vector<8xf32> to vector<8x1xf32>
    %cst_48 = arith.constant 1.280000e+02 : f32
    %138 = vector.broadcast %cst_48 : f32 to vector<8x1xf32>
    %139 = arith.divf %137, %138 : vector<8x1xf32>
    %140 = vector.broadcast %132 : vector<8x1xf32> to vector<8x128xf32>
    %141 = arith.subf %126, %140 : vector<8x128xf32>
    %cst_49 = arith.constant 9.99999996E-13 : f32
    %142 = vector.broadcast %cst_49 : f32 to vector<8x1xf32>
    %143 = arith.addf %139, %142 : vector<8x1xf32>
    %144 = math.rsqrt %143 : vector<8x1xf32>
    %145 = vector.broadcast %144 : vector<8x1xf32> to vector<8x128xf32>
    %146 = arith.mulf %141, %145 : vector<8x128xf32>
    %147 = vector.broadcast %127 : vector<1x128xf32> to vector<8x128xf32>
    %148 = arith.mulf %146, %147 : vector<8x128xf32>
    %149 = vector.broadcast %128 : vector<1x128xf32> to vector<8x128xf32>
    %150 = arith.addf %148, %149 : vector<8x128xf32>
    %c0_50 = arith.constant 0 : index
    %c0_51 = arith.constant 0 : index
    %151 = vector.load %arg12[%c0_50, %c0_51] : memref<8x128xf32, #tpu.memory_space<vmem>>, vector<8x128xf32>
    tpu.vector_store %arg12[%c0_50, %c0_51], %150 {strides = array<i32>} : memref<8x128xf32, #tpu.memory_space<vmem>>, vector<8x128xf32>,
    return
  }
  func.func @transform_0(%arg0: i32) -> (i32, i32, i32) {
    %c0_i32 = arith.constant 0 : i32
    %c0_i32_0 = arith.constant 0 : i32
    %c0_i32_1 = arith.constant 0 : i32
    return %arg0, %c0_i32, %c0_i32_0 : i32, i32, i32
  }
  func.func @transform_1(%arg0: i32) -> (i32, i32) {
    %c0_i32 = arith.constant 0 : i32
    %c0_i32_0 = arith.constant 0 : i32
    return %arg0, %c0_i32 : i32, i32
  }
  func.func @transform_2(%arg0: i32) -> (i32, i32) {
    %c0_i32 = arith.constant 0 : i32
    %c0_i32_0 = arith.constant 0 : i32
    %c0_i32_1 = arith.constant 0 : i32
    return %c0_i32, %c0_i32_0 : i32, i32
  }
  func.func @transform_3(%arg0: i32) -> (i32, i32) {
    %c0_i32 = arith.constant 0 : i32
    %c0_i32_0 = arith.constant 0 : i32
    %c0_i32_1 = arith.constant 0 : i32
    return %c0_i32, %c0_i32_0 : i32, i32
  }
  func.func @transform_4(%arg0: i32) -> (i32, i32) {
    %c0_i32 = arith.constant 0 : i32
    %c0_i32_0 = arith.constant 0 : i32
    %c0_i32_1 = arith.constant 0 : i32
    return %c0_i32, %c0_i32_0 : i32, i32
  }
  func.func @transform_5(%arg0: i32) -> (i32, i32) {
    %c0_i32 = arith.constant 0 : i32
    %c0_i32_0 = arith.constant 0 : i32
    %c0_i32_1 = arith.constant 0 : i32
    return %c0_i32, %c0_i32_0 : i32, i32
  }
  func.func @transform_6(%arg0: i32) -> (i32, i32) {
    %c0_i32 = arith.constant 0 : i32
    %c0_i32_0 = arith.constant 0 : i32
    %c0_i32_1 = arith.constant 0 : i32
    return %c0_i32, %c0_i32_0 : i32, i32
  }
  func.func @transform_7(%arg0: i32) -> (i32, i32) {
    %c0_i32 = arith.constant 0 : i32
    %c0_i32_0 = arith.constant 0 : i32
    %c0_i32_1 = arith.constant 0 : i32
    return %c0_i32, %c0_i32_0 : i32, i32
  }
  func.func @transform_8(%arg0: i32) -> (i32, i32) {
    %c0_i32 = arith.constant 0 : i32
    %c0_i32_0 = arith.constant 0 : i32
    %c0_i32_1 = arith.constant 0 : i32
    return %c0_i32, %c0_i32_0 : i32, i32
  }
  func.func @transform_9(%arg0: i32) -> (i32, i32) {
    %c0_i32 = arith.constant 0 : i32
    %c0_i32_0 = arith.constant 0 : i32
    %c0_i32_1 = arith.constant 0 : i32
    return %c0_i32, %c0_i32_0 : i32, i32
  }
  func.func @transform_10(%arg0: i32) -> (i32, i32) {
    %c0_i32 = arith.constant 0 : i32
    %c0_i32_0 = arith.constant 0 : i32
    %c0_i32_1 = arith.constant 0 : i32
    return %c0_i32, %c0_i32_0 : i32, i32
  }
  func.func @transform_11(%arg0: i32) -> (i32, i32) {
    %c0_i32 = arith.constant 0 : i32
    %c0_i32_0 = arith.constant 0 : i32
    return %arg0, %c0_i32 : i32, i32
  }
}

</mosaic_0001>

<llo_original>
// kernel: matchsum_forward.1
$region0: #{matchsum_forward.1}
  #allocation0 [shape = 'u32[]', space=smem, size = 0x4, offset = 0x4, fixed_abs, tag = 'smem constant byte address 0x4 - core index']
  #allocation1 [shape = 'u32[144,128]{1,0:T(1,128)}', space=vmem, size = 0x12000, scoped, tag = 'internal scratch']
  %s0 = inlined_call_operand.vmem [shape: bf16[16,8,128], index: 0, kind: input, shape index: {}]
  %s1 = inlined_call_operand.vmem [shape: f32[16,8], index: 1, kind: input, shape index: {}]
  %s2 = inlined_call_operand.vmem [shape: f32[6,128], index: 2, kind: input, shape index: {}]
  %s3 = inlined_call_operand.vmem [shape: bf16[128,128], index: 3, kind: input, shape index: {}]
  %s4 = inlined_call_operand.vmem [shape: bf16[128,256], index: 4, kind: input, shape index: {}]
  %s5 = inlined_call_operand.vmem [shape: f32[3,128], index: 5, kind: input, shape index: {}]
  %s6 = inlined_call_operand.vmem [shape: f32[1,256], index: 6, kind: input, shape index: {}]
  %s7 = inlined_call_operand.vmem [shape: bf16[128,128], index: 7, kind: input, shape index: {}]
  %s8 = inlined_call_operand.vmem [shape: bf16[128,256], index: 8, kind: input, shape index: {}]
  %s9 = inlined_call_operand.vmem [shape: f32[1,256], index: 9, kind: input, shape index: {}]
  %s10 = inlined_call_operand.vmem [shape: bf16[256,128], index: 10, kind: input, shape index: {}]
  %s11 = inlined_call_operand.vmem [shape: f32[16,128], index: 11, kind: output, shape index: {}]
  %s12 = sld [smem:[#allocation0]]
  $region77: #{matchsum_forward.1} parent=0
    _
  %s14 = ssub.s32 1, %s12
  %s15 = scalar_select 0, %s14, %s12
  loop: start=0, step=1, limit=4
  $region2: #{matchsum_forward.1} parent=0 // loop_pre_header
    _
  $region3: #{matchsum_forward.1} parent=0 // loop_header
    %s17 = sphi 0, %s21
    %p18 = scmp.ge.s32.totalorder %s17, 4
    %s27 = sphi 0, %s29
    %s30 = sphi 0, %s27
    %s31 = sphi 0, %s30
    %s47 = sphi 0, %s31
    %s53 = sphi 0, %s55
    %s56 = sphi 0, %s53
    %s57 = sphi 0, %s56
    %s73 = sphi 0, %s57
    %s77 = sphi 0, %s77
    %s79 = sphi 0, %s77
    %s80 = sphi 0, %s79
    %s94 = sphi 0, %s80
    %s98 = sphi 0, %s98
    %s100 = sphi 0, %s98
    %s101 = sphi 0, %s100
    %s115 = sphi 0, %s101
    %s119 = sphi 0, %s119
    %s121 = sphi 0, %s119
    %s122 = sphi 0, %s121
    %s136 = sphi 0, %s122
    %s140 = sphi 0, %s140
    %s142 = sphi 0, %s140
    %s143 = sphi 0, %s142
    %s157 = sphi 0, %s143
    %s161 = sphi 0, %s161
    %s163 = sphi 0, %s161
    %s164 = sphi 0, %s163
    %s178 = sphi 0, %s164
    %s182 = sphi 0, %s182
    %s184 = sphi 0, %s182
    %s185 = sphi 0, %s184
    %s199 = sphi 0, %s185
    %s203 = sphi 0, %s203
    %s205 = sphi 0, %s203
    %s206 = sphi 0, %s205
    %s220 = sphi 0, %s206
    %s224 = sphi 0, %s224
    %s226 = sphi 0, %s224
    %s227 = sphi 0, %s226
    %s241 = sphi 0, %s227
    %s245 = sphi 0, %s245
    %s247 = sphi 0, %s245
    %s248 = sphi 0, %s247
    %s262 = sphi 0, %s248
    %s268 = sphi 0, %s270
    %s271 = sphi 0, %s268
    %s272 = sphi 0, %s271
    %s288 = sphi 0, %s272
  $region4: #{matchsum_forward.1} parent=0 // loop_header_branch
    %20 = sbr.rel (%p18) target = $region8
  $region5: #{matchsum_forward.1} parent=0 // loop_body
    %s22 = ssub.s32 %s17, 1
    %s23 = ssub.s32 %s17, 2
    %s24 = sadd.s32 %s17, 1
    %s25 = ssub.s32 %s17, %s24
    %p26 = scmp.eq.s32.totalorder %s25, 0
    %s28 = sadd.s32 %s27, 1
    %s29 = scalar_select %p26, %s27, %s28
    %p32 = pneg %p26
    %p33 = scmp.eq.s32.totalorder %s17, 1
    %p34 = por %p32, %p33
    %p35 = scmp.ne.s32.totalorder %s27, %s30
    %p36 = scmp.eq.s32.totalorder %s17, 0
    %p37 = por %p35, %p36
    %p38 = scmp.ne.s32.totalorder %s27, %s30
    %p39 = scmp.eq.s32.totalorder %s22, 1
    %p40 = por %p38, %p39
    %p41 = scmp.ne.s32.totalorder %s30, %s31
    %p42 = scmp.eq.s32.totalorder %s22, 0
    %p43 = por %p41, %p42
    %p44 = scmp.ne.s32.totalorder %s30, %s31
    %p45 = scmp.eq.s32.totalorder %s23, 1
    %p46 = por %p44, %p45
    %p48 = scmp.ne.s32.totalorder %s31, %s47
    %p49 = scmp.eq.s32.totalorder %s23, 0
    %p50 = por %p48, %p49
    %s51 = ssub.s32 %s17, %s24
    %p52 = scmp.eq.s32.totalorder %s51, 0
    %s54 = sadd.s32 %s53, 1
    %s55 = scalar_select %p52, %s53, %s54
    %p58 = pneg %p52
    %p59 = scmp.eq.s32.totalorder %s17, 1
    %p60 = por %p58, %p59
    %p61 = scmp.ne.s32.totalorder %s53, %s56
    %p62 = scmp.eq.s32.totalorder %s17, 0
    %p63 = por %p61, %p62
    %p64 = scmp.ne.s32.totalorder %s53, %s56
    %p65 = scmp.eq.s32.totalorder %s22, 1
    %p66 = por %p64, %p65
    %p67 = scmp.ne.s32.totalorder %s56, %s57
    %p68 = scmp.eq.s32.totalorder %s22, 0
    %p69 = por %p67, %p68
    %p70 = scmp.ne.s32.totalorder %s56, %s57
    %p71 = scmp.eq.s32.totalorder %s23, 1
    %p72 = por %p70, %p71
    %p74 = scmp.ne.s32.totalorder %s57, %s73
    %p75 = scmp.eq.s32.totalorder %s23, 0
    %p76 = por %p74, %p75
    %s78 = sadd.s32 %s77, 1
    %p81 = scmp.eq.s32.totalorder %s17, 1
    %p82 = scmp.ne.s32.totalorder %s77, %s79
    %p83 = scmp.eq.s32.totalorder %s17, 0
    %p84 = por %p82, %p83
    %p85 = scmp.ne.s32.totalorder %s77, %s79
    %p86 = scmp.eq.s32.totalorder %s22, 1
    %p87 = por %p85, %p86
    %p88 = scmp.ne.s32.totalorder %s79, %s80
    %p89 = scmp.eq.s32.totalorder %s22, 0
    %p90 = por %p88, %p89
    %p91 = scmp.ne.s32.totalorder %s79, %s80
    %p92 = scmp.eq.s32.totalorder %s23, 1
    %p93 = por %p91, %p92
    %p95 = scmp.ne.s32.totalorder %s80, %s94
    %p96 = scmp.eq.s32.totalorder %s23, 0
    %p97 = por %p95, %p96
    %s99 = sadd.s32 %s98, 1
    %p102 = scmp.eq.s32.totalorder %s17, 1
    %p103 = scmp.ne.s32.totalorder %s98, %s100
    %p104 = scmp.eq.s32.totalorder %s17, 0
    %p105 = por %p103, %p104
    %p106 = scmp.ne.s32.totalorder %s98, %s100
    %p107 = scmp.eq.s32.totalorder %s22, 1
    %p108 = por %p106, %p107
    %p109 = scmp.ne.s32.totalorder %s100, %s101
    %p110 = scmp.eq.s32.totalorder %s22, 0
    %p111 = por %p109, %p110
    %p112 = scmp.ne.s32.totalorder %s100, %s101
    %p113 = scmp.eq.s32.totalorder %s23, 1
    %p114 = por %p112, %p113
    %p116 = scmp.ne.s32.totalorder %s101, %s115
    %p117 = scmp.eq.s32.totalorder %s23, 0
    %p118 = por %p116, %p117
    %s120 = sadd.s32 %s119, 1
    %p123 = scmp.eq.s32.totalorder %s17, 1
    %p124 = scmp.ne.s32.totalorder %s119, %s121
    %p125 = scmp.eq.s32.totalorder %s17, 0
    %p126 = por %p124, %p125
    %p127 = scmp.ne.s32.totalorder %s119, %s121
    %p128 = scmp.eq.s32.totalorder %s22, 1
    %p129 = por %p127, %p128
    %p130 = scmp.ne.s32.totalorder %s121, %s122
    %p131 = scmp.eq.s32.totalorder %s22, 0
    %p132 = por %p130, %p131
    %p133 = scmp.ne.s32.totalorder %s121, %s122
    %p134 = scmp.eq.s32.totalorder %s23, 1
    %p135 = por %p133, %p134
    %p137 = scmp.ne.s32.totalorder %s122, %s136
    %p138 = scmp.eq.s32.totalorder %s23, 0
    %p139 = por %p137, %p138
    %s141 = sadd.s32 %s140, 1
    %p144 = scmp.eq.s32.totalorder %s17, 1
    %p145 = scmp.ne.s32.totalorder %s140, %s142
    %p146 = scmp.eq.s32.totalorder %s17, 0
    %p147 = por %p145, %p146
    %p148 = scmp.ne.s32.totalorder %s140, %s142
    %p149 = scmp.eq.s32.totalorder %s22, 1
    %p150 = por %p148, %p149
    %p151 = scmp.ne.s32.totalorder %s142, %s143
    %p152 = scmp.eq.s32.totalorder %s22, 0
    %p153 = por %p151, %p152
    %p154 = scmp.ne.s32.totalorder %s142, %s143
    %p155 = scmp.eq.s32.totalorder %s23, 1
    %p156 = por %p154, %p155
    %p158 = scmp.ne.s32.totalorder %s143, %s157
    %p159 = scmp.eq.s32.totalorder %s23, 0
    %p160 = por %p158, %p159
    %s162 = sadd.s32 %s161, 1
    %p165 = scmp.eq.s32.totalorder %s17, 1
    %p166 = scmp.ne.s32.totalorder %s161, %s163
    %p167 = scmp.eq.s32.totalorder %s17, 0
    %p168 = por %p166, %p167
    %p169 = scmp.ne.s32.totalorder %s161, %s163
    %p170 = scmp.eq.s32.totalorder %s22, 1
    %p171 = por %p169, %p170
    %p172 = scmp.ne.s32.totalorder %s163, %s164
    %p173 = scmp.eq.s32.totalorder %s22, 0
    %p174 = por %p172, %p173
    %p175 = scmp.ne.s32.totalorder %s163, %s164
    %p176 = scmp.eq.s32.totalorder %s23, 1
    %p177 = por %p175, %p176
    %p179 = scmp.ne.s32.totalorder %s164, %s178
    %p180 = scmp.eq.s32.totalorder %s23, 0
    %p181 = por %p179, %p180
    %s183 = sadd.s32 %s182, 1
    %p186 = scmp.eq.s32.totalorder %s17, 1
    %p187 = scmp.ne.s32.totalorder %s182, %s184
    %p188 = scmp.eq.s32.totalorder %s17, 0
    %p189 = por %p187, %p188
    %p190 = scmp.ne.s32.totalorder %s182, %s184
    %p191 = scmp.eq.s32.totalorder %s22, 1
    %p192 = por %p190, %p191
    %p193 = scmp.ne.s32.totalorder %s184, %s185
    %p194 = scmp.eq.s32.totalorder %s22, 0
    %p195 = por %p193, %p194
    %p196 = scmp.ne.s32.totalorder %s184, %s185
    %p197 = scmp.eq.s32.totalorder %s23, 1
    %p198 = por %p196, %p197
    %p200 = scmp.ne.s32.totalorder %s185, %s199
    %p201 = scmp.eq.s32.totalorder %s23, 0
    %p202 = por %p200, %p201
    %s204 = sadd.s32 %s203, 1
    %p207 = scmp.eq.s32.totalorder %s17, 1
    %p208 = scmp.ne.s32.totalorder %s203, %s205
    %p209 = scmp.eq.s32.totalorder %s17, 0
    %p210 = por %p208, %p209
    %p211 = scmp.ne.s32.totalorder %s203, %s205
    %p212 = scmp.eq.s32.totalorder %s22, 1
    %p213 = por %p211, %p212
    %p214 = scmp.ne.s32.totalorder %s205, %s206
    %p215 = scmp.eq.s32.totalorder %s22, 0
    %p216 = por %p214, %p215
    %p217 = scmp.ne.s32.totalorder %s205, %s206
    %p218 = scmp.eq.s32.totalorder %s23, 1
    %p219 = por %p217, %p218
    %p221 = scmp.ne.s32.totalorder %s206, %s220
    %p222 = scmp.eq.s32.totalorder %s23, 0
    %p223 = por %p221, %p222
    %s225 = sadd.s32 %s224, 1
    %p228 = scmp.eq.s32.totalorder %s17, 1
    %p229 = scmp.ne.s32.totalorder %s224, %s226
    %p230 = scmp.eq.s32.totalorder %s17, 0
    %p231 = por %p229, %p230
    %p232 = scmp.ne.s32.totalorder %s224, %s226
    %p233 = scmp.eq.s32.totalorder %s22, 1
    %p234 = por %p232, %p233
    %p235 = scmp.ne.s32.totalorder %s226, %s227
    %p236 = scmp.eq.s32.totalorder %s22, 0
    %p237 = por %p235, %p236
    %p238 = scmp.ne.s32.totalorder %s226, %s227
    %p239 = scmp.eq.s32.totalorder %s23, 1
    %p240 = por %p238, %p239
    %p242 = scmp.ne.s32.totalorder %s227, %s241
    %p243 = scmp.eq.s32.totalorder %s23, 0
    %p244 = por %p242, %p243
    %s246 = sadd.s32 %s245, 1
    %p249 = scmp.eq.s32.totalorder %s17, 1
    %p250 = scmp.ne.s32.totalorder %s245, %s247
    %p251 = scmp.eq.s32.totalorder %s17, 0
    %p252 = por %p250, %p251
    %p253 = scmp.ne.s32.totalorder %s245, %s247
    %p254 = scmp.eq.s32.totalorder %s22, 1
    %p255 = por %p253, %p254
    %p256 = scmp.ne.s32.totalorder %s247, %s248
    %p257 = scmp.eq.s32.totalorder %s22, 0
    %p258 = por %p256, %p257
    %p259 = scmp.ne.s32.totalorder %s247, %s248
    %p260 = scmp.eq.s32.totalorder %s23, 1
    %p261 = por %p259, %p260
    %p263 = scmp.ne.s32.totalorder %s248, %s262
    %p264 = scmp.eq.s32.totalorder %s23, 0
    %p265 = por %p263, %p264
    %s266 = ssub.s32 %s17, %s24
    %p267 = scmp.eq.s32.totalorder %s266, 0
    %s269 = sadd.s32 %s268, 1
    %s270 = scalar_select %p267, %s268, %s269
    %p273 = pneg %p267
    %p274 = scmp.eq.s32.totalorder %s17, 1
    %p275 = por %p273, %p274
    %p276 = scmp.ne.s32.totalorder %s268, %s271
    %p277 = scmp.eq.s32.totalorder %s17, 0
    %p278 = por %p276, %p277
    %p279 = scmp.ne.s32.totalorder %s268, %s271
    %p280 = scmp.eq.s32.totalorder %s22, 1
    %p281 = por %p279, %p280
    %p282 = scmp.ne.s32.totalorder %s271, %s272
    %p283 = scmp.eq.s32.totalorder %s22, 0
    %p284 = por %p282, %p283
    %p285 = scmp.ne.s32.totalorder %s271, %s272
    %p286 = scmp.eq.s32.totalorder %s23, 1
    %p287 = por %p285, %p286
    %p289 = scmp.ne.s32.totalorder %s272, %s288
    %p290 = scmp.eq.s32.totalorder %s23, 0
    %p291 = por %p289, %p290
    %p292 = scmp.le.s32.totalorder 1, %s17
    %p293 = scmp.lt.s32.totalorder %s17, 3
    %p294 = pnand %p292, %p293
    %p295 = pneg %p294
    // Predicated region
    $region9: #{matchsum_forward.1} parent=5 // pred_check
      _
    $region10: #{matchsum_forward.1} parent=5 // pred_check_branch
      %297 = sbr.rel (%p294) target = $region12
    $region11: #{matchsum_forward.1} parent=5 // pred_region
      %s298 = ssub.s32 %s17, 1
      // Predicated region
      $region13: #{matchsum_forward.1} parent=11 // pred_check
        %p299 = pneg %p90
      $region14: #{matchsum_forward.1} parent=11 // pred_check_branch
        %301 = sbr.rel (%p299) target = $region16
      $region15: #{matchsum_forward.1} parent=11 // pred_region
        _
      $region16: #{matchsum_forward.1} parent=11 // pred_fallthru
        _
      // Predicated region
      $region17: #{matchsum_forward.1} parent=11 // pred_check
        %p302 = pneg %p111
      $region18: #{matchsum_forward.1} parent=11 // pred_check_branch
        %304 = sbr.rel (%p302) target = $region20
      $region19: #{matchsum_forward.1} parent=11 // pred_region
        _
      $region20: #{matchsum_forward.1} parent=11 // pred_fallthru
        _
      // Predicated region
      $region21: #{matchsum_forward.1} parent=11 // pred_check
        %p305 = pneg %p132
      $region22: #{matchsum_forward.1} parent=11 // pred_check_branch
        %307 = sbr.rel (%p305) target = $region24
      $region23: #{matchsum_forward.1} parent=11 // pred_region
        _
      $region24: #{matchsum_forward.1} parent=11 // pred_fallthru
        _
      // Predicated region
      $region25: #{matchsum_forward.1} parent=11 // pred_check
        %p308 = pneg %p153
      $region26: #{matchsum_forward.1} parent=11 // pred_check_branch
        %310 = sbr.rel (%p308) target = $region28
      $region27: #{matchsum_forward.1} parent=11 // pred_region
        _
      $region28: #{matchsum_forward.1} parent=11 // pred_fallthru
        _
      // Predicated region
      $region29: #{matchsum_forward.1} parent=11 // pred_check
        %p311 = pneg %p174
      $region30: #{matchsum_forward.1} parent=11 // pred_check_branch
        %313 = sbr.rel (%p311) target = $region32
      $region31: #{matchsum_forward.1} parent=11 // pred_region
        _
      $region32: #{matchsum_forward.1} parent=11 // pred_fallthru
        _
      // Predicated region
      $region33: #{matchsum_forward.1} parent=11 // pred_check
        %p314 = pneg %p195
      $region34: #{matchsum_forward.1} parent=11 // pred_check_branch
        %316 = sbr.rel (%p314) target = $region36
      $region35: #{matchsum_forward.1} parent=11 // pred_region
        _
      $region36: #{matchsum_forward.1} parent=11 // pred_fallthru
        _
      // Predicated region
      $region37: #{matchsum_forward.1} parent=11 // pred_check
        %p317 = pneg %p216
      $region38: #{matchsum_forward.1} parent=11 // pred_check_branch
        %319 = sbr.rel (%p317) target = $region40
      $region39: #{matchsum_forward.1} parent=11 // pred_region
        _
      $region40: #{matchsum_forward.1} parent=11 // pred_fallthru
        _
      // Predicated region
      $region41: #{matchsum_forward.1} parent=11 // pred_check
        %p320 = pneg %p237
      $region42: #{matchsum_forward.1} parent=11 // pred_check_branch
        %322 = sbr.rel (%p320) target = $region44
      $region43: #{matchsum_forward.1} parent=11 // pred_region
        _
      $region44: #{matchsum_forward.1} parent=11 // pred_fallthru
        _
      // Predicated region
      $region45: #{matchsum_forward.1} parent=11 // pred_check
        %p323 = pneg %p258
      $region46: #{matchsum_forward.1} parent=11 // pred_check_branch
        %325 = sbr.rel (%p323) target = $region48
      $region47: #{matchsum_forward.1} parent=11 // pred_region
        _
      $region48: #{matchsum_forward.1} parent=11 // pred_fallthru
        _
    $region12: #{matchsum_forward.1} parent=5 // pred_fallthru
      _
    %p326 = scmp.lt.s32.totalorder %s17, 2
    // Predicated region
    $region49: #{matchsum_forward.1} parent=5 // pred_check
      %p327 = pneg %p326
    $region50: #{matchsum_forward.1} parent=5 // pred_check_branch
      %329 = sbr.rel (%p327) target = $region52
    $region51: #{matchsum_forward.1} parent=5 // pred_region
      // Predicated region
      $region53: #{matchsum_forward.1} parent=51 // pred_check
        %p330 = pneg %p37
      $region54: #{matchsum_forward.1} parent=51 // pred_check_branch
        %332 = sbr.rel (%p330) target = $region56
      $region55: #{matchsum_forward.1} parent=51 // pred_region
        %s333 = smul.u32 8, %s17
        %p334 = scmp.lt.s32.totalorder %s333, 15
        %s335 = scalar_select %p334, %s333, 15
        %s336 = smul.addr %s335, 4
        %s337 = scalar_lea.vmem %s0, %s336
        %s338 = smul.u32 8, %s17
      $region56: #{matchsum_forward.1} parent=51 // pred_fallthru
        _
      // Predicated region
      $region57: #{matchsum_forward.1} parent=51 // pred_check
        %p339 = pneg %p63
      $region58: #{matchsum_forward.1} parent=51 // pred_check_branch
        %341 = sbr.rel (%p339) target = $region60
      $region59: #{matchsum_forward.1} parent=51 // pred_region
        %p342 = scmp.lt.s32.totalorder %s17, 1
        %s343 = scalar_select %p342, %s17, 1
        %s344 = smul.addr %s343, 8
        %s345 = scalar_lea.vmem %s1, %s344
      $region60: #{matchsum_forward.1} parent=51 // pred_fallthru
        _
    $region52: #{matchsum_forward.1} parent=5 // pred_fallthru
      _
    %p346 = scmp.le.s32.totalorder 1, %s17
    %p347 = scmp.lt.s32.totalorder %s17, 3
    %p348 = pnand %p346, %p347
    %p349 = pneg %p348
    // Predicated region
    $region61: #{matchsum_forward.1} parent=5 // pred_check
      _
    $region62: #{matchsum_forward.1} parent=5 // pred_check_branch
      %351 = sbr.rel (%p348) target = $region64
    $region63: #{matchsum_forward.1} parent=5 // pred_region
      %s352 = ssub.s32 %s17, 1
      %s353 = smul.u32 8, %s22
      %p354 = scmp.lt.s32.totalorder %s353, 15
      %s355 = scalar_select %p354, %s353, 15
      %s356 = smul.addr %s355, 4
      %s357 = scalar_lea.vmem %s0, %s356
      %p358 = pneg %p43
      %p359 = pneg %p40
      %p360 = scmp.lt.s32.totalorder %s22, 1
      %s361 = scalar_select %p360, %s22, 1
      %s362 = smul.addr %s361, 8
      %s363 = scalar_lea.vmem %s1, %s362
      %p364 = pneg %p69
      %p365 = pneg %p66
      %p366 = pneg %p90
      %p367 = pneg %p87
      %p368 = pneg %p111
      %p369 = pneg %p108
      %p370 = pneg %p132
      %p371 = pneg %p129
      %p372 = pneg %p153
      %p373 = pneg %p150
      %p374 = pneg %p174
      %p375 = pneg %p171
      %p376 = pneg %p195
      %p377 = pneg %p192
      %p378 = pneg %p216
      %p379 = pneg %p213
      %p380 = pneg %p237
      %p381 = pneg %p234
      %p382 = pneg %p258
      %p383 = pneg %p255
      %p384 = pneg %p284
      %p385 = pneg %p281
      %p386 = scmp.lt.s32.totalorder %s22, 1
      %s387 = scalar_select %p386, %s22, 1
      %s388 = smul.addr %s387, 8
      %s389 = scalar_lea.vmem %s11, %s388
      %s390 = smul.u32 8, %s22
      %p391 = scmp.lt.s32.totalorder %s390, 15
      %s392 = scalar_select %p391, %s390, 15
      %s393 = smul.addr %s392, 4
      %s394 = scalar_lea.vmem %s0, %s393
      %s395 = smul.u32 8, %s22
      %p396 = scmp.lt.s32.totalorder %s22, 1
      %s397 = scalar_select %p396, %s22, 1
      %s398 = smul.addr %s397, 8
      %s399 = scalar_lea.vmem %s1, %s398
      %p400 = scmp.lt.s32.totalorder %s22, 1
      %s401 = scalar_select %p400, %s22, 1
      %s402 = smul.addr %s401, 8
      %s403 = scalar_lea.vmem %s11, %s402
      %v405 = vld [vmem:[%s2] sm:$0x3f]
      %v406 = vld [vmem:[%s5] sm:$0x7]
      %v407 = vld [vmem:[%s394] sm:$0xf]
      %v408 = vld [vmem:[%s394 + $0x4] sm:$0xf]
      %v409 = vld [vmem:[%s394 + $0x8] sm:$0xf]
      %v410 = vld [vmem:[%s394 + $0xc] sm:$0xf]
      %v411 = vld [vmem:[%s394 + $0x10] sm:$0xf]
      %v412 = vld [vmem:[%s394 + $0x14] sm:$0xf]
      %v413 = vld [vmem:[%s394 + $0x18] sm:$0xf]
      %v414 = vld [vmem:[%s394 + $0x1c] sm:$0xf]
      %v415 = vunpack.c.l.bf16 %v407
      %v416 = vunpack.c.l.bf16 %v408
      %v417 = vunpack.c.l.bf16 %v409
      %v418 = vunpack.c.l.bf16 %v410
      %v419 = vunpack.c.l.bf16 %v411
      %v420 = vunpack.c.l.bf16 %v412
      %v421 = vunpack.c.l.bf16 %v413
      %v422 = vunpack.c.l.bf16 %v414
      %423 = vadd.xlane.f32.xlu0 %v415
      %v424 = vpop.xlane.xlu0 %423
      %425 = vadd.xlane.f32.xlu0 %v416
      %v426 = vpop.xlane.xlu0 %425
      %427 = vadd.xlane.f32.xlu0 %v417
      %v428 = vpop.xlane.xlu0 %427
      %429 = vadd.xlane.f32.xlu0 %v418
      %v430 = vpop.xlane.xlu0 %429
      %431 = vadd.xlane.f32.xlu0 %v419
      %v432 = vpop.xlane.xlu0 %431
      %433 = vadd.xlane.f32.xlu0 %v420
      %v434 = vpop.xlane.xlu0 %433
      %435 = vadd.xlane.f32.xlu0 %v421
      %v436 = vpop.xlane.xlu0 %435
      %437 = vadd.xlane.f32.xlu0 %v422
      %v438 = vpop.xlane.xlu0 %437
      %v439 = vrcp.pop 128.0
      %v440 = vmul.f32 %v424, %v439
      %v441 = vmul.f32 %v426, %v439
      %v442 = vmul.f32 %v428, %v439
      %v443 = vmul.f32 %v430, %v439
      %v444 = vmul.f32 %v432, %v439
      %v445 = vmul.f32 %v434, %v439
      %v446 = vmul.f32 %v436, %v439
      %v447 = vmul.f32 %v438, %v439
      %v448 = vsub.f32 %v415, %v440
      %v449 = vsub.f32 %v416, %v441
      %v450 = vsub.f32 %v417, %v442
      %v451 = vsub.f32 %v418, %v443
      %v452 = vsub.f32 %v419, %v444
      %v453 = vsub.f32 %v420, %v445
      %v454 = vsub.f32 %v421, %v446
      %v455 = vsub.f32 %v422, %v447
      %v456 = vmul.f32 %v448, %v448
      %v457 = vmul.f32 %v449, %v449
      %v458 = vmul.f32 %v450, %v450
      %v459 = vmul.f32 %v451, %v451
      %v460 = vmul.f32 %v452, %v452
      %v461 = vmul.f32 %v453, %v453
      %v462 = vmul.f32 %v454, %v454
      %v463 = vmul.f32 %v455, %v455
      %464 = vadd.xlane.f32.xlu0 %v456
      %v465 = vpop.xlane.xlu0 %464
      %466 = vadd.xlane.f32.xlu0 %v457
      %v467 = vpop.xlane.xlu0 %466
      %468 = vadd.xlane.f32.xlu0 %v458
      %v469 = vpop.xlane.xlu0 %468
      %470 = vadd.xlane.f32.xlu0 %v459
      %v471 = vpop.xlane.xlu0 %470
      %472 = vadd.xlane.f32.xlu0 %v460
      %v473 = vpop.xlane.xlu0 %472
      %474 = vadd.xlane.f32.xlu0 %v461
      %v475 = vpop.xlane.xlu0 %474
      %476 = vadd.xlane.f32.xlu0 %v462
      %v477 = vpop.xlane.xlu0 %476
      %478 = vadd.xlane.f32.xlu0 %v463
      %v479 = vpop.xlane.xlu0 %478
      %v480 = vmul.f32 %v465, %v439
      %v481 = vmul.f32 %v467, %v439
      %v482 = vmul.f32 %v469, %v439
      %v483 = vmul.f32 %v471, %v439
      %v484 = vmul.f32 %v473, %v439
      %v485 = vmul.f32 %v475, %v439
      %v486 = vmul.f32 %v477, %v439
      %v487 = vmul.f32 %v479, %v439
      %v488 = vadd.f32 %v480, 1e-12
      %v489 = vadd.f32 %v481, 1e-12
      %v490 = vadd.f32 %v482, 1e-12
      %v491 = vadd.f32 %v483, 1e-12
      %v492 = vadd.f32 %v484, 1e-12
      %v493 = vadd.f32 %v485, 1e-12
      %v494 = vadd.f32 %v486, 1e-12
      %v495 = vadd.f32 %v487, 1e-12
      %v496 = vrsqrt.pop %v488
      %v497 = vrsqrt.pop %v489
      %v498 = vrsqrt.pop %v490
      %v499 = vrsqrt.pop %v491
      %v500 = vrsqrt.pop %v492
      %v501 = vrsqrt.pop %v493
      %v502 = vrsqrt.pop %v494
      %v503 = vrsqrt.pop %v495
      %v504 = vmul.f32 %v448, %v496
      %v505 = vmul.f32 %v449, %v497
      %v506 = vmul.f32 %v450, %v498
      %v507 = vmul.f32 %v451, %v499
      %v508 = vmul.f32 %v452, %v500
      %v509 = vmul.f32 %v453, %v501
      %v510 = vmul.f32 %v454, %v502
      %v511 = vmul.f32 %v455, %v503
      %v512 = vlaneseq
      %v513 = vshrl.u32 %v512, 7
      %v514 = vsub.s32 0, %v513
      %v515 = vrot.slane %v405, %v514
      %v516 = vmul.f32 %v504, %v515
      %v517 = vmul.f32 %v505, %v515
      %v518 = vmul.f32 %v506, %v515
      %v519 = vmul.f32 %v507, %v515
      %v520 = vmul.f32 %v508, %v515
      %v521 = vmul.f32 %v509, %v515
      %v522 = vmul.f32 %v510, %v515
      %v523 = vmul.f32 %v511, %v515
      %v524 = vlaneseq
      %v525 = vshrl.u32 %v524, 7
      %v526 = vsub.s32 1, %v525
      %v527 = vrot.slane %v405, %v526
      %v528 = vadd.f32 %v516, %v527
      %v529 = vadd.f32 %v517, %v527
      %v530 = vadd.f32 %v518, %v527
      %v531 = vadd.f32 %v519, %v527
      %v532 = vadd.f32 %v520, %v527
      %v533 = vadd.f32 %v521, %v527
      %v534 = vadd.f32 %v522, %v527
      %v535 = vadd.f32 %v523, %v527
      %v536 = vpack.c.bf16 %v529, %v528
      %v537 = vpack.c.bf16 %v531, %v530
      %v538 = vpack.c.bf16 %v533, %v532
      %v539 = vpack.c.bf16 %v535, %v534
      %v540 = vld [vmem:[%s4] sm:$0xff]
      %v541 = vld [vmem:[%s4 + $0x8] sm:$0xff]
      %v542 = vld [vmem:[%s4 + $0x10] sm:$0xff]
      %v543 = vld [vmem:[%s4 + $0x18] sm:$0xff]
      %v544 = vld [vmem:[%s4 + $0x20] sm:$0xff]
      %v545 = vld [vmem:[%s4 + $0x28] sm:$0xff]
      %v546 = vld [vmem:[%s4 + $0x30] sm:$0xff]
      %v547 = vld [vmem:[%s4 + $0x38] sm:$0xff]
      %v548 = vld [vmem:[%s4 + $0x40] sm:$0xff]
      %v549 = vld [vmem:[%s4 + $0x48] sm:$0xff]
      %v550 = vld [vmem:[%s4 + $0x50] sm:$0xff]
      %v551 = vld [vmem:[%s4 + $0x58] sm:$0xff]
      %v552 = vld [vmem:[%s4 + $0x60] sm:$0xff]
      %v553 = vld [vmem:[%s4 + $0x68] sm:$0xff]
      %v554 = vld [vmem:[%s4 + $0x70] sm:$0xff]
      %v555 = vld [vmem:[%s4 + $0x78] sm:$0xff]
      %v556 = vld [vmem:[%s6] sm:$0x3]
      %v558 = vlaneseq
      %v559 = vshrl.u32 %v558, 7
      %v560 = vsub.s32 0, %v559
      %v561 = vrot.slane %v556, %v560
      %v562 = vlaneseq
      %v563 = vshrl.u32 %v562, 7
      %v564 = vsub.s32 1, %v563
      %v565 = vrot.slane %v556, %v564
      %v584 = vunpack.c.l.b16 %v540
      %v585 = vunpack.c.h.b16 %v540
      %v586 = vunpack.c.l.b16 %v541
      %v587 = vunpack.c.h.b16 %v541
      %v588 = vunpack.c.l.b16 %v542
      %v589 = vunpack.c.h.b16 %v542
      %v590 = vunpack.c.l.b16 %v543
      %v591 = vunpack.c.h.b16 %v543
      %v592 = vunpack.c.l.b16 %v544
      %v593 = vunpack.c.h.b16 %v544
      %v594 = vunpack.c.l.b16 %v545
      %v595 = vunpack.c.h.b16 %v545
      %v596 = vunpack.c.l.b16 %v546
      %v597 = vunpack.c.h.b16 %v546
      %v598 = vunpack.c.l.b16 %v547
      %v599 = vunpack.c.h.b16 %v547
      %v600 = vunpack.c.l.b16 %v548
      %v601 = vunpack.c.h.b16 %v548
      %v602 = vunpack.c.l.b16 %v549
      %v603 = vunpack.c.h.b16 %v549
      %v604 = vunpack.c.l.b16 %v550
      %v605 = vunpack.c.h.b16 %v550
      %v606 = vunpack.c.l.b16 %v551
      %v607 = vunpack.c.h.b16 %v551
      %v608 = vunpack.c.l.b16 %v552
      %v609 = vunpack.c.h.b16 %v552
      %v610 = vunpack.c.l.b16 %v553
      %v611 = vunpack.c.h.b16 %v553
      %v612 = vunpack.c.l.b16 %v554
      %v613 = vunpack.c.h.b16 %v554
      %v614 = vunpack.c.l.b16 %v555
      %v615 = vunpack.c.h.b16 %v555
      %v616 = vpack.c.b16 %v586, %v584
      %v617 = vpack.c.b16 %v587, %v585
      %v618 = vpack.c.b16 %v590, %v588
      %v619 = vpack.c.b16 %v591, %v589
      %v620 = vpack.c.b16 %v594, %v592
      %v621 = vpack.c.b16 %v595, %v593
      %v622 = vpack.c.b16 %v598, %v596
      %v623 = vpack.c.b16 %v599, %v597
      %v624 = vpack.c.b16 %v602, %v600
      %v625 = vpack.c.b16 %v603, %v601
      %v626 = vpack.c.b16 %v606, %v604
      %v627 = vpack.c.b16 %v607, %v605
      %v628 = vpack.c.b16 %v610, %v608
      %v629 = vpack.c.b16 %v611, %v609
      %v630 = vpack.c.b16 %v614, %v612
      %v631 = vpack.c.b16 %v615, %v613
      %648 = vmatprep.subr.bf16.mxu0 %v617
      %649 = vmatpush1.bf16.msra.mxu0 %v616
      %650 = vmatprep.subr.bf16.mxu0 %v619
      %651 = vmatpush1.bf16.msra.mxu0 %v618
      %652 = vmatprep.subr.bf16.mxu0 %v621
      %653 = vmatpush1.bf16.msra.mxu0 %v620
      %654 = vmatprep.subr.bf16.mxu0 %v623
      %655 = vmatpush1.bf16.msra.mxu0 %v622
      %656 = vmatprep.subr.bf16.mxu0 %v625
      %657 = vmatpush1.bf16.msra.mxu0 %v624
      %658 = vmatprep.subr.bf16.mxu0 %v627
      %659 = vmatpush1.bf16.msra.mxu0 %v626
      %660 = vmatprep.subr.bf16.mxu0 %v629
      %661 = vmatpush1.bf16.msra.mxu0 %v628
      %662 = vmatprep.subr.bf16.mxu0 %v631
      %663 = vmatpush1.bf16.msra.mxu0 %v630
      %664 = vmatprep.subr.bf16.mxu0 0
      %665 = vmatpush1.bf16.msra.mxu0 0
      %666 = vmatprep.subr.bf16.mxu0 0
      %667 = vmatpush1.bf16.msra.mxu0 0
      %668 = vmatprep.subr.bf16.mxu0 0
      %669 = vmatpush1.bf16.msra.mxu0 0
      %670 = vmatprep.subr.bf16.mxu0 0
      %671 = vmatpush1.bf16.msra.mxu0 0
      %672 = vmatprep.subr.bf16.mxu0 0
      %673 = vmatpush1.bf16.msra.mxu0 0
      %674 = vmatprep.subr.bf16.mxu0 0
      %675 = vmatpush1.bf16.msra.mxu0 0
      %676 = vmatprep.subr.bf16.mxu0 0
      %677 = vmatpush1.bf16.msra.mxu0 0
      %678 = vmatprep.subr.bf16.mxu0 0
      %679 = vmatpush1.bf16.msra.mxu0 0
      %680 = vmatprep.mubr.bf16.mxu0 0
      %681 = vmatmul.mubr.bf16.gmra.mrb[0].mxu0 %v536
      %v682 = vpop.f32.mrb[0].mxu0
      %v683 = vadd.f32 %v561, %v682
      %v684 = vpop.f32.mrb[0].mxu0
      %v685 = vadd.f32 %v565, %v684
      %v686 = vpop.f32.mrb[0].mxu0
      %v687 = vadd.f32 %v561, %v686
      %v688 = vpop.f32.mrb[0].mxu0
      %v689 = vadd.f32 %v565, %v688
      %690 = vmatprep.mubr.bf16.mxu0 0
      %691 = vmatmul.mubr.bf16.gmra.mrb[0].mxu0 %v537
      %v692 = vpop.f32.mrb[0].mxu0
      %v693 = vadd.f32 %v561, %v692
      %v694 = vpop.f32.mrb[0].mxu0
      %v695 = vadd.f32 %v565, %v694
      %v696 = vpop.f32.mrb[0].mxu0
      %v697 = vadd.f32 %v561, %v696
      %v698 = vpop.f32.mrb[0].mxu0
      %v699 = vadd.f32 %v565, %v698
      %700 = vmatprep.mubr.bf16.mxu0 0
      %701 = vmatmul.mubr.bf16.gmra.mrb[0].mxu0 %v538
      %v702 = vpop.f32.mrb[0].mxu0
      %v703 = vadd.f32 %v561, %v702
      %v704 = vpop.f32.mrb[0].mxu0
      %v705 = vadd.f32 %v565, %v704
      %v706 = vpop.f32.mrb[0].mxu0
      %v707 = vadd.f32 %v561, %v706
      %v708 = vpop.f32.mrb[0].mxu0
      %v709 = vadd.f32 %v565, %v708
      %710 = vmatprep.mubr.bf16.mxu0 0
      %711 = vmatmul.mubr.bf16.gmra.mrb[0].mxu0 %v539
      %v712 = vpop.f32.mrb[0].mxu0
      %v713 = vadd.f32 %v561, %v712
      %v714 = vpop.f32.mrb[0].mxu0
      %v715 = vadd.f32 %v565, %v714
      %v716 = vpop.f32.mrb[0].mxu0
      %v717 = vadd.f32 %v561, %v716
      %v718 = vpop.f32.mrb[0].mxu0
      %v719 = vadd.f32 %v565, %v718
      %720 = vdwg.mxu0
      %v721 = vpack.c.bf16 %v528, %v528
      %v722 = vpack.c.bf16 %v529, %v529
      %v723 = vpack.c.bf16 %v530, %v530
      %v724 = vpack.c.bf16 %v531, %v531
      %v725 = vpack.c.bf16 %v532, %v532
      %v726 = vpack.c.bf16 %v533, %v533
      %v727 = vpack.c.bf16 %v534, %v534
      %v728 = vpack.c.bf16 %v535, %v535
      %v729 = vld [vmem:[%s3] sm:$0xf]
      %v730 = vld [vmem:[%s3 + $0x4] sm:$0xf]
      %v731 = vld [vmem:[%s3 + $0x8] sm:$0xf]
      %v732 = vld [vmem:[%s3 + $0xc] sm:$0xf]
      %v733 = vld [vmem:[%s3 + $0x10] sm:$0xf]
      %v734 = vld [vmem:[%s3 + $0x14] sm:$0xf]
      %v735 = vld [vmem:[%s3 + $0x18] sm:$0xf]
      %v736 = vld [vmem:[%s3 + $0x1c] sm:$0xf]
      %v737 = vld [vmem:[%s3 + $0x20] sm:$0xf]
      %v738 = vld [vmem:[%s3 + $0x24] sm:$0xf]
      %v739 = vld [vmem:[%s3 + $0x28] sm:$0xf]
      %v740 = vld [vmem:[%s3 + $0x2c] sm:$0xf]
      %v741 = vld [vmem:[%s3 + $0x30] sm:$0xf]
      %v742 = vld [vmem:[%s3 + $0x34] sm:$0xf]
      %v743 = vld [vmem:[%s3 + $0x38] sm:$0xf]
      %v744 = vld [vmem:[%s3 + $0x3c] sm:$0xf]
      %v745 = vlaneseq
      %v746 = vshrl.u32 %v745, 7
      %v747 = vsub.s32 0, %v746
      %v748 = vrot.slane %v406, %v747
      %v757 = vunpack.c.l.b16 %v721
      %v758 = vunpack.c.l.b16 %v722
      %v759 = vunpack.c.l.b16 %v723
      %v760 = vunpack.c.l.b16 %v724
      %v761 = vunpack.c.l.b16 %v725
      %v762 = vunpack.c.l.b16 %v726
      %v763 = vunpack.c.l.b16 %v727
      %v764 = vunpack.c.l.b16 %v728
      %v765 = vrot.slane %v758, 7
      %vm766 = vcmask 1041409
      %v767 = vsel %vm766, %v765, %v757
      %v768 = vrot.slane %v759, 6
      %vm769 = vcmask 1042434
      %v770 = vsel %vm769, %v768, %v767
      %v771 = vrot.slane %v760, 5
      %vm772 = vcmask 1043459
      %v773 = vsel %vm772, %v771, %v770
      %v774 = vrot.slane %v761, 4
      %vm775 = vcmask 1044484
      %v776 = vsel %vm775, %v774, %v773
      %v777 = vrot.slane %v762, 3
      %vm778 = vcmask 1045509
      %v779 = vsel %vm778, %v777, %v776
      %v780 = vrot.slane %v763, 2
      %vm781 = vcmask 1046534
      %v782 = vsel %vm781, %v780, %v779
      %v783 = vrot.slane %v764, 1
      %vm784 = vcmask 1047559
      %v785 = vsel %vm784, %v783, %v782
      %v786 = vpack.c.b16 %v785, %v785
      %v804 = vunpack.c.l.b16 %v729
      %v805 = vunpack.c.l.b16 %v730
      %v806 = vunpack.c.l.b16 %v731
      %v807 = vunpack.c.l.b16 %v732
      %v808 = vunpack.c.l.b16 %v733
      %v809 = vunpack.c.l.b16 %v734
      %v810 = vunpack.c.l.b16 %v735
      %v811 = vunpack.c.l.b16 %v736
      %v812 = vunpack.c.l.b16 %v737
      %v813 = vunpack.c.l.b16 %v738
      %v814 = vunpack.c.l.b16 %v739
      %v815 = vunpack.c.l.b16 %v740
      %v816 = vunpack.c.l.b16 %v741
      %v817 = vunpack.c.l.b16 %v742
      %v818 = vunpack.c.l.b16 %v743
      %v819 = vunpack.c.l.b16 %v744
      %v820 = vpack.c.b16 %v805, %v804
      %v821 = vpack.c.b16 %v807, %v806
      %v822 = vpack.c.b16 %v809, %v808
      %v823 = vpack.c.b16 %v811, %v810
      %v824 = vpack.c.b16 %v813, %v812
      %v825 = vpack.c.b16 %v815, %v814
      %v826 = vpack.c.b16 %v817, %v816
      %v827 = vpack.c.b16 %v819, %v818
      %836 = vmatprep.subr.bf16.mxu0 0
      %837 = vmatpush1.bf16.msra.mxu0 %v820
      %838 = vmatprep.subr.bf16.mxu0 0
      %839 = vmatpush1.bf16.msra.mxu0 %v821
      %840 = vmatprep.subr.bf16.mxu0 0
      %841 = vmatpush1.bf16.msra.mxu0 %v822
      %842 = vmatprep.subr.bf16.mxu0 0
      %843 = vmatpush1.bf16.msra.mxu0 %v823
      %844 = vmatprep.subr.bf16.mxu0 0
      %845 = vmatpush1.bf16.msra.mxu0 %v824
      %846 = vmatprep.subr.bf16.mxu0 0
      %847 = vmatpush1.bf16.msra.mxu0 %v825
      %848 = vmatprep.subr.bf16.mxu0 0
      %849 = vmatpush1.bf16.msra.mxu0 %v826
      %850 = vmatprep.subr.bf16.mxu0 0
      %851 = vmatpush1.bf16.msra.mxu0 %v827
      %852 = vmatprep.subr.bf16.mxu0 0
      %853 = vmatpush1.bf16.msra.mxu0 0
      %854 = vmatprep.subr.bf16.mxu0 0
      %855 = vmatpush1.bf16.msra.mxu0 0
      %856 = vmatprep.subr.bf16.mxu0 0
      %857 = vmatpush1.bf16.msra.mxu0 0
      %858 = vmatprep.subr.bf16.mxu0 0
      %859 = vmatpush1.bf16.msra.mxu0 0
      %860 = vmatprep.subr.bf16.mxu0 0
      %861 = vmatpush1.bf16.msra.mxu0 0
      %862 = vmatprep.subr.bf16.mxu0 0
      %863 = vmatpush1.bf16.msra.mxu0 0
      %864 = vmatprep.subr.bf16.mxu0 0
      %865 = vmatpush1.bf16.msra.mxu0 0
      %866 = vmatprep.subr.bf16.mxu0 0
      %867 = vmatpush1.bf16.msra.mxu0 0
      %868 = vmatprep.mubr.bf16.mxu0 0
      %869 = vmatmul.mubr.bf16.gmra.mrb[0].mxu0 %v786
      %v870 = vpop.f32.mrb[0].mxu0
      %v871 = vadd.f32 %v748, %v870
      %v872 = vpop.f32.mrb[0].mxu0
      %v873 = vpop.f32.mrb[0].mxu0
      %v874 = vpop.f32.mrb[0].mxu0
      %875 = vdwg.mxu0
      %v877 = vcombine.high %v871, %v871
      %v879 = vunpack.c.l.s4 1966171168
      %v880 = vunpack.c.0.s8 %v879
      %v881 = vlaneseq
      %v882 = vshrl.u32 %v881, 7
      %v883 = vsub.s32 %v880, %v882
      %v884 = vrot.slane %v871, %v883
      %v886 = vunpack.c.l.s4 1966171168
      %v887 = vunpack.c.0.s8 %v886
      %v888 = vlaneseq
      %v889 = vshrl.u32 %v888, 7
      %v890 = vsub.s32 %v887, %v889
      %v891 = vrot.slane %v877, %v890
      %v892 = vcombine.high %v884, %v884
      %v893 = vcombine.high %v891, %v891
      %v895 = vunpack.c.l.s4 1966171168
      %v896 = vunpack.c.0.s8 %v895
      %v897 = vlaneseq
      %v898 = vshrl.u32 %v897, 7
      %v899 = vsub.s32 %v896, %v898
      %v900 = vrot.slane %v884, %v899
      %v902 = vunpack.c.l.s4 1966171168
      %v903 = vunpack.c.0.s8 %v902
      %v904 = vlaneseq
      %v905 = vshrl.u32 %v904, 7
      %v906 = vsub.s32 %v903, %v905
      %v907 = vrot.slane %v891, %v906
      %v909 = vunpack.c.l.s4 1966171168
      %v910 = vunpack.c.0.s8 %v909
      %v911 = vlaneseq
      %v912 = vshrl.u32 %v911, 7
      %v913 = vsub.s32 %v910, %v912
      %v914 = vrot.slane %v892, %v913
      %v916 = vunpack.c.l.s4 1966171168
      %v917 = vunpack.c.0.s8 %v916
      %v918 = vlaneseq
      %v919 = vshrl.u32 %v918, 7
      %v920 = vsub.s32 %v917, %v919
      %v921 = vrot.slane %v893, %v920
      %v922 = vcombine.high %v900, %v900
      %v923 = vcombine.high %v907, %v907
      %v924 = vcombine.high %v914, %v914
      %v925 = vcombine.high %v921, %v921
      %v926 = vlaneseq
      %v927 = vshrl.u32 %v926, 7
      %v928 = vsub.s32 0, %v927
      %v929 = vrot.slane %v900, %v928
      %v930 = vlaneseq
      %v931 = vshrl.u32 %v930, 7
      %v932 = vsub.s32 0, %v931
      %v933 = vrot.slane %v914, %v932
      %v934 = vlaneseq
      %v935 = vshrl.u32 %v934, 7
      %v936 = vsub.s32 0, %v935
      %v937 = vrot.slane %v922, %v936
      %v938 = vlaneseq
      %v939 = vshrl.u32 %v938, 7
      %v940 = vsub.s32 0, %v939
      %v941 = vrot.slane %v924, %v940
      %v942 = vlaneseq
      %v943 = vshrl.u32 %v942, 7
      %v944 = vsub.s32 0, %v943
      %v945 = vrot.slane %v907, %v944
      %v946 = vlaneseq
      %v947 = vshrl.u32 %v946, 7
      %v948 = vsub.s32 0, %v947
      %v949 = vrot.slane %v921, %v948
      %v950 = vlaneseq
      %v951 = vshrl.u32 %v950, 7
      %v952 = vsub.s32 0, %v951
      %v953 = vrot.slane %v923, %v952
      %v954 = vlaneseq
      %v955 = vshrl.u32 %v954, 7
      %v956 = vsub.s32 0, %v955
      %v957 = vrot.slane %v925, %v956
      %v966 = vmul.f32 %v929, %v683
      %v967 = vmul.f32 %v933, %v687
      %v968 = vmul.f32 %v937, %v693
      %v969 = vmul.f32 %v941, %v697
      %v970 = vmul.f32 %v945, %v703
      %v971 = vmul.f32 %v949, %v707
      %v972 = vmul.f32 %v953, %v713
      %v973 = vmul.f32 %v957, %v717
      %974 = vadd.xlane.f32.xlu0 %v966
      %v975 = vpop.xlane.xlu0 %974
      %976 = vadd.xlane.f32.xlu0 %v967
      %v977 = vpop.xlane.xlu0 %976
      %978 = vadd.xlane.f32.xlu0 %v968
      %v979 = vpop.xlane.xlu0 %978
      %980 = vadd.xlane.f32.xlu0 %v969
      %v981 = vpop.xlane.xlu0 %980
      %982 = vadd.xlane.f32.xlu0 %v970
      %v983 = vpop.xlane.xlu0 %982
      %984 = vadd.xlane.f32.xlu0 %v971
      %v985 = vpop.xlane.xlu0 %984
      %986 = vadd.xlane.f32.xlu0 %v972
      %v987 = vpop.xlane.xlu0 %986
      %988 = vadd.xlane.f32.xlu0 %v973
      %v989 = vpop.xlane.xlu0 %988
      %v990 = vmul.f32 %v975, 0.088388346
      %v991 = vmul.f32 %v977, 0.088388346
      %v992 = vmul.f32 %v979, 0.088388346
      %v993 = vmul.f32 %v981, 0.088388346
      %v994 = vmul.f32 %v983, 0.088388346
      %v995 = vmul.f32 %v985, 0.088388346
      %v996 = vmul.f32 %v987, 0.088388346
      %v997 = vmul.f32 %v989, 0.088388346
      %v998 = vld [vmem:[%s399] sm:$0xff]
      %v1000 = vlaneseq
      %v1001 = vshrl.u32 %v1000, 7
      %v1002 = vsub.s32 0, %v1001
      %v1003 = vrot.slane %v998, %v1002
      %1005 = vbcast.lane.b32.xlu0 %v1003, 256
      %v1006 = vpop.permute.xlu0 %1005
      %v1007 = vlaneseq
      %v1008 = vshrl.u32 %v1007, 7
      %v1009 = vsub.s32 1, %v1008
      %v1010 = vrot.slane %v998, %v1009
      %1012 = vbcast.lane.b32.xlu0 %v1010, 256
      %v1013 = vpop.permute.xlu0 %1012
      %v1014 = vlaneseq
      %v1015 = vshrl.u32 %v1014, 7
      %v1016 = vsub.s32 2, %v1015
      %v1017 = vrot.slane %v998, %v1016
      %1019 = vbcast.lane.b32.xlu0 %v1017, 256
      %v1020 = vpop.permute.xlu0 %1019
      %v1021 = vlaneseq
      %v1022 = vshrl.u32 %v1021, 7
      %v1023 = vsub.s32 3, %v1022
      %v1024 = vrot.slane %v998, %v1023
      %1026 = vbcast.lane.b32.xlu0 %v1024, 256
      %v1027 = vpop.permute.xlu0 %1026
      %v1028 = vlaneseq
      %v1029 = vshrl.u32 %v1028, 7
      %v1030 = vsub.s32 4, %v1029
      %v1031 = vrot.slane %v998, %v1030
      %1033 = vbcast.lane.b32.xlu0 %v1031, 256
      %v1034 = vpop.permute.xlu0 %1033
      %v1035 = vlaneseq
      %v1036 = vshrl.u32 %v1035, 7
      %v1037 = vsub.s32 5, %v1036
      %v1038 = vrot.slane %v998, %v1037
      %1040 = vbcast.lane.b32.xlu0 %v1038, 256
      %v1041 = vpop.permute.xlu0 %1040
      %v1042 = vlaneseq
      %v1043 = vshrl.u32 %v1042, 7
      %v1044 = vsub.s32 6, %v1043
      %v1045 = vrot.slane %v998, %v1044
      %1047 = vbcast.lane.b32.xlu0 %v1045, 256
      %v1048 = vpop.permute.xlu0 %1047
      %v1049 = vlaneseq
      %v1050 = vshrl.u32 %v1049, 7
      %v1051 = vsub.s32 7, %v1050
      %v1052 = vrot.slane %v998, %v1051
      %1054 = vbcast.lane.b32.xlu0 %v1052, 256
      %v1055 = vpop.permute.xlu0 %1054
      %v1064 = vadd.f32 %v990, %v1006
      %v1065 = vadd.f32 %v991, %v1013
      %v1066 = vadd.f32 %v992, %v1020
      %v1067 = vadd.f32 %v993, %v1027
      %v1068 = vadd.f32 %v994, %v1034
      %v1069 = vadd.f32 %v995, %v1041
      %v1070 = vadd.f32 %v996, %v1048
      %v1071 = vadd.f32 %v997, %v1055
      %1080 = vset.pattern.permute.xlu0 0
      %1081 = vperm.xlu0 %1080, %v1064
      %v1082 = vpop.permute.xlu0 %1081
      %1083 = vset.pattern.permute.xlu0 0
      %1084 = vperm.xlu0 %1083, %v1065
      %v1085 = vpop.permute.xlu0 %1084
      %1086 = vset.pattern.permute.xlu0 0
      %1087 = vperm.xlu0 %1086, %v1066
      %v1088 = vpop.permute.xlu0 %1087
      %1089 = vset.pattern.permute.xlu0 0
      %1090 = vperm.xlu0 %1089, %v1067
      %v1091 = vpop.permute.xlu0 %1090
      %1092 = vset.pattern.permute.xlu0 0
      %1093 = vperm.xlu0 %1092, %v1068
      %v1094 = vpop.permute.xlu0 %1093
      %1095 = vset.pattern.permute.xlu0 0
      %1096 = vperm.xlu0 %1095, %v1069
      %v1097 = vpop.permute.xlu0 %1096
      %1098 = vset.pattern.permute.xlu0 0
      %1099 = vperm.xlu0 %1098, %v1070
      %v1100 = vpop.permute.xlu0 %1099
      %1101 = vset.pattern.permute.xlu0 0
      %1102 = vperm.xlu0 %1101, %v1071
      %v1103 = vpop.permute.xlu0 %1102
      %v1104 = vlaneseq
      %v1105 = vand.u32 %v1104, 127
      %v1106 = vlaneseq
      %v1107 = vshrl.u32 %v1106, 7
      %v1108 = vsub.s32 %v1105, %v1107
      %v1109 = vrot.slane %v1082, %v1108
      %v1110 = vlaneseq
      %v1111 = vshrl.u32 %v1110, 7
      %v1112 = vsub.s32 %v1105, %v1111
      %v1113 = vrot.slane %v1085, %v1112
      %v1114 = vlaneseq
      %v1115 = vshrl.u32 %v1114, 7
      %v1116 = vsub.s32 %v1105, %v1115
      %v1117 = vrot.slane %v1088, %v1116
      %v1118 = vlaneseq
      %v1119 = vshrl.u32 %v1118, 7
      %v1120 = vsub.s32 %v1105, %v1119
      %v1121 = vrot.slane %v1091, %v1120
      %v1122 = vlaneseq
      %v1123 = vshrl.u32 %v1122, 7
      %v1124 = vsub.s32 %v1105, %v1123
      %v1125 = vrot.slane %v1094, %v1124
      %v1126 = vlaneseq
      %v1127 = vshrl.u32 %v1126, 7
      %v1128 = vsub.s32 %v1105, %v1127
      %v1129 = vrot.slane %v1097, %v1128
      %v1130 = vlaneseq
      %v1131 = vshrl.u32 %v1130, 7
      %v1132 = vsub.s32 %v1105, %v1131
      %v1133 = vrot.slane %v1100, %v1132
      %v1134 = vlaneseq
      %v1135 = vshrl.u32 %v1134, 7
      %v1136 = vsub.s32 %v1105, %v1135
      %v1137 = vrot.slane %v1103, %v1136
      %v1138 = vsel %vm766, %v1113, %v1109
      %v1139 = vsel %vm769, %v1117, %v1138
      %v1140 = vsel %vm772, %v1121, %v1139
      %v1141 = vsel %vm775, %v1125, %v1140
      %v1142 = vsel %vm778, %v1129, %v1141
      %v1143 = vsel %vm781, %v1133, %v1142
      %v1144 = vsel %vm784, %v1137, %v1143
      %vm1146 = vcmask 64512
      %v1147 = vsel %vm1146, %v1144, -inf
      %1148 = vmax.xlane.f32.xlu0 %v1147
      %v1149 = vpop.xlane.xlu0 %1148
      %v1151 = vlaneseq
      %v1152 = vshrl.u32 %v1151, 7
      %v1153 = vsub.s32 0, %v1152
      %v1154 = vrot.slane %v1149, %v1153
      %v1155 = vlaneseq
      %v1156 = vshrl.u32 %v1155, 7
      %v1157 = vsub.s32 1, %v1156
      %v1158 = vrot.slane %v1149, %v1157
      %v1159 = vlaneseq
      %v1160 = vshrl.u32 %v1159, 7
      %v1161 = vsub.s32 2, %v1160
      %v1162 = vrot.slane %v1149, %v1161
      %v1163 = vlaneseq
      %v1164 = vshrl.u32 %v1163, 7
      %v1165 = vsub.s32 3, %v1164
      %v1166 = vrot.slane %v1149, %v1165
      %v1167 = vlaneseq
      %v1168 = vshrl.u32 %v1167, 7
      %v1169 = vsub.s32 4, %v1168
      %v1170 = vrot.slane %v1149, %v1169
      %v1171 = vlaneseq
      %v1172 = vshrl.u32 %v1171, 7
      %v1173 = vsub.s32 5, %v1172
      %v1174 = vrot.slane %v1149, %v1173
      %v1175 = vlaneseq
      %v1176 = vshrl.u32 %v1175, 7
      %v1177 = vsub.s32 6, %v1176
      %v1178 = vrot.slane %v1149, %v1177
      %v1179 = vlaneseq
      %v1180 = vshrl.u32 %v1179, 7
      %v1181 = vsub.s32 7, %v1180
      %v1182 = vrot.slane %v1149, %v1181
      %v1191 = vsub.f32 %v1064, %v1154
      %v1192 = vsub.f32 %v1065, %v1158
      %v1193 = vsub.f32 %v1066, %v1162
      %v1194 = vsub.f32 %v1067, %v1166
      %v1195 = vsub.f32 %v1068, %v1170
      %v1196 = vsub.f32 %v1069, %v1174
      %v1197 = vsub.f32 %v1070, %v1178
      %v1198 = vsub.f32 %v1071, %v1182
      %v1199 = vmul.f32 %v1191, 1.442695
      %v1200 = vpow.pop %v1199
      %v1201 = vmul.f32 %v1192, 1.442695
      %v1202 = vpow.pop %v1201
      %v1203 = vmul.f32 %v1193, 1.442695
      %v1204 = vpow.pop %v1203
      %v1205 = vmul.f32 %v1194, 1.442695
      %v1206 = vpow.pop %v1205
      %v1207 = vmul.f32 %v1195, 1.442695
      %v1208 = vpow.pop %v1207
      %v1209 = vmul.f32 %v1196, 1.442695
      %v1210 = vpow.pop %v1209
      %v1211 = vmul.f32 %v1197, 1.442695
      %v1212 = vpow.pop %v1211
      %v1213 = vmul.f32 %v1198, 1.442695
      %v1214 = vpow.pop %v1213
      %1223 = vset.pattern.permute.xlu0 0
      %1224 = vperm.xlu0 %1223, %v1200
      %v1225 = vpop.permute.xlu0 %1224
      %1226 = vset.pattern.permute.xlu0 0
      %1227 = vperm.xlu0 %1226, %v1202
      %v1228 = vpop.permute.xlu0 %1227
      %1229 = vset.pattern.permute.xlu0 0
      %1230 = vperm.xlu0 %1229, %v1204
      %v1231 = vpop.permute.xlu0 %1230
      %1232 = vset.pattern.permute.xlu0 0
      %1233 = vperm.xlu0 %1232, %v1206
      %v1234 = vpop.permute.xlu0 %1233
      %1235 = vset.pattern.permute.xlu0 0
      %1236 = vperm.xlu0 %1235, %v1208
      %v1237 = vpop.permute.xlu0 %1236
      %1238 = vset.pattern.permute.xlu0 0
      %1239 = vperm.xlu0 %1238, %v1210
      %v1240 = vpop.permute.xlu0 %1239
      %1241 = vset.pattern.permute.xlu0 0
      %1242 = vperm.xlu0 %1241, %v1212
      %v1243 = vpop.permute.xlu0 %1242
      %1244 = vset.pattern.permute.xlu0 0
      %1245 = vperm.xlu0 %1244, %v1214
      %v1246 = vpop.permute.xlu0 %1245
      %v1247 = vlaneseq
      %v1248 = vshrl.u32 %v1247, 7
      %v1249 = vsub.s32 %v1105, %v1248
      %v1250 = vrot.slane %v1225, %v1249
      %v1251 = vlaneseq
      %v1252 = vshrl.u32 %v1251, 7
      %v1253 = vsub.s32 %v1105, %v1252
      %v1254 = vrot.slane %v1228, %v1253
      %v1255 = vlaneseq
      %v1256 = vshrl.u32 %v1255, 7
      %v1257 = vsub.s32 %v1105, %v1256
      %v1258 = vrot.slane %v1231, %v1257
      %v1259 = vlaneseq
      %v1260 = vshrl.u32 %v1259, 7
      %v1261 = vsub.s32 %v1105, %v1260
      %v1262 = vrot.slane %v1234, %v1261
      %v1263 = vlaneseq
      %v1264 = vshrl.u32 %v1263, 7
      %v1265 = vsub.s32 %v1105, %v1264
      %v1266 = vrot.slane %v1237, %v1265
      %v1267 = vlaneseq
      %v1268 = vshrl.u32 %v1267, 7
      %v1269 = vsub.s32 %v1105, %v1268
      %v1270 = vrot.slane %v1240, %v1269
      %v1271 = vlaneseq
      %v1272 = vshrl.u32 %v1271, 7
      %v1273 = vsub.s32 %v1105, %v1272
      %v1274 = vrot.slane %v1243, %v1273
      %v1275 = vlaneseq
      %v1276 = vshrl.u32 %v1275, 7
      %v1277 = vsub.s32 %v1105, %v1276
      %v1278 = vrot.slane %v1246, %v1277
      %v1279 = vsel %vm766, %v1254, %v1250
      %v1280 = vsel %vm769, %v1258, %v1279
      %v1281 = vsel %vm772, %v1262, %v1280
      %v1282 = vsel %vm775, %v1266, %v1281
      %v1283 = vsel %vm778, %v1270, %v1282
      %v1284 = vsel %vm781, %v1274, %v1283
      %v1285 = vsel %vm784, %v1278, %v1284
      %v1287 = vsel %vm1146, %v1285, 0.0
      %1288 = vadd.xlane.f32.xlu0 %v1287
      %v1289 = vpop.xlane.xlu0 %1288
      %v1298 = vmul.f32 %v1225, %v685
      %v1299 = vmul.f32 %v1228, %v689
      %v1300 = vmul.f32 %v1231, %v695
      %v1301 = vmul.f32 %v1234, %v699
      %v1302 = vmul.f32 %v1237, %v705
      %v1303 = vmul.f32 %v1240, %v709
      %v1304 = vmul.f32 %v1243, %v715
      %v1305 = vmul.f32 %v1246, %v719
      %v1306 = vrot.slane %v1298, 4
      %v1307 = vadd.f32 %v1298, %v1306
      %v1308 = vrot.slane %v1307, 2
      %v1309 = vadd.f32 %v1307, %v1308
      %v1310 = vrot.slane %v1309, 1
      %v1311 = vadd.f32 %v1309, %v1310
      %v1312 = vrot.slane %v1299, 4
      %v1313 = vadd.f32 %v1299, %v1312
      %v1314 = vrot.slane %v1313, 2
      %v1315 = vadd.f32 %v1313, %v1314
      %v1316 = vrot.slane %v1315, 1
      %v1317 = vadd.f32 %v1315, %v1316
      %v1318 = vrot.slane %v1300, 4
      %v1319 = vadd.f32 %v1300, %v1318
      %v1320 = vrot.slane %v1319, 2
      %v1321 = vadd.f32 %v1319, %v1320
      %v1322 = vrot.slane %v1321, 1
      %v1323 = vadd.f32 %v1321, %v1322
      %v1324 = vrot.slane %v1301, 4
      %v1325 = vadd.f32 %v1301, %v1324
      %v1326 = vrot.slane %v1325, 2
      %v1327 = vadd.f32 %v1325, %v1326
      %v1328 = vrot.slane %v1327, 1
      %v1329 = vadd.f32 %v1327, %v1328
      %v1330 = vrot.slane %v1302, 4
      %v1331 = vadd.f32 %v1302, %v1330
      %v1332 = vrot.slane %v1331, 2
      %v1333 = vadd.f32 %v1331, %v1332
      %v1334 = vrot.slane %v1333, 1
      %v1335 = vadd.f32 %v1333, %v1334
      %v1336 = vrot.slane %v1303, 4
      %v1337 = vadd.f32 %v1303, %v1336
      %v1338 = vrot.slane %v1337, 2
      %v1339 = vadd.f32 %v1337, %v1338
      %v1340 = vrot.slane %v1339, 1
      %v1341 = vadd.f32 %v1339, %v1340
      %v1342 = vrot.slane %v1304, 4
      %v1343 = vadd.f32 %v1304, %v1342
      %v1344 = vrot.slane %v1343, 2
      %v1345 = vadd.f32 %v1343, %v1344
      %v1346 = vrot.slane %v1345, 1
      %v1347 = vadd.f32 %v1345, %v1346
      %v1348 = vrot.slane %v1305, 4
      %v1349 = vadd.f32 %v1305, %v1348
      %v1350 = vrot.slane %v1349, 2
      %v1351 = vadd.f32 %v1349, %v1350
      %v1352 = vrot.slane %v1351, 1
      %v1353 = vadd.f32 %v1351, %v1352
      %v1354 = vrcp.pop %v1289
      %v1356 = vrot.slane %v1354, 1
      %v1357 = vrot.slane %v1354, 2
      %v1358 = vrot.slane %v1354, 3
      %v1359 = vrot.slane %v1354, 4
      %v1360 = vrot.slane %v1354, 5
      %v1361 = vrot.slane %v1354, 6
      %v1362 = vrot.slane %v1354, 7
      %v1371 = vmul.f32 %v1311, %v1354
      %v1372 = vmul.f32 %v1317, %v1356
      %v1373 = vmul.f32 %v1323, %v1357
      %v1374 = vmul.f32 %v1329, %v1358
      %v1375 = vmul.f32 %v1335, %v1359
      %v1376 = vmul.f32 %v1341, %v1360
      %v1377 = vmul.f32 %v1347, %v1361
      %v1378 = vmul.f32 %v1353, %v1362
      %v1379 = vpack.c.bf16 %v1371, %v1371
      %v1380 = vpack.c.bf16 %v1372, %v1372
      %v1381 = vpack.c.bf16 %v1373, %v1373
      %v1382 = vpack.c.bf16 %v1374, %v1374
      %v1383 = vpack.c.bf16 %v1375, %v1375
      %v1384 = vpack.c.bf16 %v1376, %v1376
      %v1385 = vpack.c.bf16 %v1377, %v1377
      %v1386 = vpack.c.bf16 %v1378, %v1378
      %v1387 = vld [vmem:[%s7] sm:$0xf]
      %v1388 = vld [vmem:[%s7 + $0x4] sm:$0xf]
      %v1389 = vld [vmem:[%s7 + $0x8] sm:$0xf]
      %v1390 = vld [vmem:[%s7 + $0xc] sm:$0xf]
      %v1391 = vld [vmem:[%s7 + $0x10] sm:$0xf]
      %v1392 = vld [vmem:[%s7 + $0x14] sm:$0xf]
      %v1393 = vld [vmem:[%s7 + $0x18] sm:$0xf]
      %v1394 = vld [vmem:[%s7 + $0x1c] sm:$0xf]
      %v1395 = vld [vmem:[%s7 + $0x20] sm:$0xf]
      %v1396 = vld [vmem:[%s7 + $0x24] sm:$0xf]
      %v1397 = vld [vmem:[%s7 + $0x28] sm:$0xf]
      %v1398 = vld [vmem:[%s7 + $0x2c] sm:$0xf]
      %v1399 = vld [vmem:[%s7 + $0x30] sm:$0xf]
      %v1400 = vld [vmem:[%s7 + $0x34] sm:$0xf]
      %v1401 = vld [vmem:[%s7 + $0x38] sm:$0xf]
      %v1402 = vld [vmem:[%s7 + $0x3c] sm:$0xf]
      %v1403 = vlaneseq
      %v1404 = vshrl.u32 %v1403, 7
      %v1405 = vsub.s32 1, %v1404
      %v1406 = vrot.slane %v406, %v1405
      %v1415 = vunpack.c.l.b16 %v1379
      %v1416 = vunpack.c.l.b16 %v1380
      %v1417 = vunpack.c.l.b16 %v1381
      %v1418 = vunpack.c.l.b16 %v1382
      %v1419 = vunpack.c.l.b16 %v1383
      %v1420 = vunpack.c.l.b16 %v1384
      %v1421 = vunpack.c.l.b16 %v1385
      %v1422 = vunpack.c.l.b16 %v1386
      %v1423 = vrot.slane %v1416, 7
      %v1424 = vsel %vm766, %v1423, %v1415
      %v1425 = vrot.slane %v1417, 6
      %v1426 = vsel %vm769, %v1425, %v1424
      %v1427 = vrot.slane %v1418, 5
      %v1428 = vsel %vm772, %v1427, %v1426
      %v1429 = vrot.slane %v1419, 4
      %v1430 = vsel %vm775, %v1429, %v1428
      %v1431 = vrot.slane %v1420, 3
      %v1432 = vsel %vm778, %v1431, %v1430
      %v1433 = vrot.slane %v1421, 2
      %v1434 = vsel %vm781, %v1433, %v1432
      %v1435 = vrot.slane %v1422, 1
      %v1436 = vsel %vm784, %v1435, %v1434
      %v1437 = vpack.c.b16 %v1436, %v1436
      %v1455 = vunpack.c.l.b16 %v1387
      %v1456 = vunpack.c.l.b16 %v1388
      %v1457 = vunpack.c.l.b16 %v1389
      %v1458 = vunpack.c.l.b16 %v1390
      %v1459 = vunpack.c.l.b16 %v1391
      %v1460 = vunpack.c.l.b16 %v1392
      %v1461 = vunpack.c.l.b16 %v1393
      %v1462 = vunpack.c.l.b16 %v1394
      %v1463 = vunpack.c.l.b16 %v1395
      %v1464 = vunpack.c.l.b16 %v1396
      %v1465 = vunpack.c.l.b16 %v1397
      %v1466 = vunpack.c.l.b16 %v1398
      %v1467 = vunpack.c.l.b16 %v1399
      %v1468 = vunpack.c.l.b16 %v1400
      %v1469 = vunpack.c.l.b16 %v1401
      %v1470 = vunpack.c.l.b16 %v1402
      %v1471 = vpack.c.b16 %v1456, %v1455
      %v1472 = vpack.c.b16 %v1458, %v1457
      %v1473 = vpack.c.b16 %v1460, %v1459
      %v1474 = vpack.c.b16 %v1462, %v1461
      %v1475 = vpack.c.b16 %v1464, %v1463
      %v1476 = vpack.c.b16 %v1466, %v1465
      %v1477 = vpack.c.b16 %v1468, %v1467
      %v1478 = vpack.c.b16 %v1470, %v1469
      %1487 = vmatprep.subr.bf16.mxu0 0
      %1488 = vmatpush1.bf16.msra.mxu0 %v1471
      %1489 = vmatprep.subr.bf16.mxu0 0
      %1490 = vmatpush1.bf16.msra.mxu0 %v1472
      %1491 = vmatprep.subr.bf16.mxu0 0
      %1492 = vmatpush1.bf16.msra.mxu0 %v1473
      %1493 = vmatprep.subr.bf16.mxu0 0
      %1494 = vmatpush1.bf16.msra.mxu0 %v1474
      %1495 = vmatprep.subr.bf16.mxu0 0
      %1496 = vmatpush1.bf16.msra.mxu0 %v1475
      %1497 = vmatprep.subr.bf16.mxu0 0
      %1498 = vmatpush1.bf16.msra.mxu0 %v1476
      %1499 = vmatprep.subr.bf16.mxu0 0
      %1500 = vmatpush1.bf16.msra.mxu0 %v1477
      %1501 = vmatprep.subr.bf16.mxu0 0
      %1502 = vmatpush1.bf16.msra.mxu0 %v1478
      %1503 = vmatprep.subr.bf16.mxu0 0
      %1504 = vmatpush1.bf16.msra.mxu0 0
      %1505 = vmatprep.subr.bf16.mxu0 0
      %1506 = vmatpush1.bf16.msra.mxu0 0
      %1507 = vmatprep.subr.bf16.mxu0 0
      %1508 = vmatpush1.bf16.msra.mxu0 0
      %1509 = vmatprep.subr.bf16.mxu0 0
      %1510 = vmatpush1.bf16.msra.mxu0 0
      %1511 = vmatprep.subr.bf16.mxu0 0
      %1512 = vmatpush1.bf16.msra.mxu0 0
      %1513 = vmatprep.subr.bf16.mxu0 0
      %1514 = vmatpush1.bf16.msra.mxu0 0
      %1515 = vmatprep.subr.bf16.mxu0 0
      %1516 = vmatpush1.bf16.msra.mxu0 0
      %1517 = vmatprep.subr.bf16.mxu0 0
      %1518 = vmatpush1.bf16.msra.mxu0 0
      %1519 = vmatprep.mubr.bf16.mxu0 0
      %1520 = vmatmul.mubr.bf16.gmra.mrb[0].mxu0 %v1437
      %v1521 = vpop.f32.mrb[0].mxu0
      %v1522 = vadd.f32 %v1406, %v1521
      %v1523 = vpop.f32.mrb[0].mxu0
      %v1524 = vpop.f32.mrb[0].mxu0
      %v1525 = vpop.f32.mrb[0].mxu0
      %1526 = vdwg.mxu0
      %v1528 = vrot.slane %v1522, 1
      %v1529 = vrot.slane %v1522, 2
      %v1530 = vrot.slane %v1522, 3
      %v1531 = vrot.slane %v1522, 4
      %v1532 = vrot.slane %v1522, 5
      %v1533 = vrot.slane %v1522, 6
      %v1534 = vrot.slane %v1522, 7
      %v1543 = vadd.f32 %v528, %v1522
      %v1544 = vadd.f32 %v529, %v1528
      %v1545 = vadd.f32 %v530, %v1529
      %v1546 = vadd.f32 %v531, %v1530
      %v1547 = vadd.f32 %v532, %v1531
      %v1548 = vadd.f32 %v533, %v1532
      %v1549 = vadd.f32 %v534, %v1533
      %v1550 = vadd.f32 %v535, %v1534
      %v1559 = vrot.slane %v1544, 7
      %v1560 = vsel %vm766, %v1559, %v1543
      %v1561 = vrot.slane %v1545, 6
      %v1562 = vsel %vm769, %v1561, %v1560
      %v1563 = vrot.slane %v1546, 5
      %v1564 = vsel %vm772, %v1563, %v1562
      %v1565 = vrot.slane %v1547, 4
      %v1566 = vsel %vm775, %v1565, %v1564
      %v1567 = vrot.slane %v1548, 3
      %v1568 = vsel %vm778, %v1567, %v1566
      %v1569 = vrot.slane %v1549, 2
      %v1570 = vsel %vm781, %v1569, %v1568
      %v1571 = vrot.slane %v1550, 1
      %v1572 = vsel %vm784, %v1571, %v1570
      %1574 = vadd.xlane.f32.xlu0 %v1572
      %v1575 = vpop.xlane.xlu0 %1574
      %v1576 = vmul.f32 %v1575, %v439
      %v1578 = vrot.slane %v1576, 1
      %v1579 = vrot.slane %v1576, 2
      %v1580 = vrot.slane %v1576, 3
      %v1581 = vrot.slane %v1576, 4
      %v1582 = vrot.slane %v1576, 5
      %v1583 = vrot.slane %v1576, 6
      %v1584 = vrot.slane %v1576, 7
      %v1593 = vsub.f32 %v1543, %v1576
      %v1594 = vsub.f32 %v1544, %v1578
      %v1595 = vsub.f32 %v1545, %v1579
      %v1596 = vsub.f32 %v1546, %v1580
      %v1597 = vsub.f32 %v1547, %v1581
      %v1598 = vsub.f32 %v1548, %v1582
      %v1599 = vsub.f32 %v1549, %v1583
      %v1600 = vsub.f32 %v1550, %v1584
      %v1601 = vmul.f32 %v1593, %v1593
      %v1602 = vmul.f32 %v1594, %v1594
      %v1603 = vmul.f32 %v1595, %v1595
      %v1604 = vmul.f32 %v1596, %v1596
      %v1605 = vmul.f32 %v1597, %v1597
      %v1606 = vmul.f32 %v1598, %v1598
      %v1607 = vmul.f32 %v1599, %v1599
      %v1608 = vmul.f32 %v1600, %v1600
      %v1617 = vrot.slane %v1602, 7
      %v1618 = vsel %vm766, %v1617, %v1601
      %v1619 = vrot.slane %v1603, 6
      %v1620 = vsel %vm769, %v1619, %v1618
      %v1621 = vrot.slane %v1604, 5
      %v1622 = vsel %vm772, %v1621, %v1620
      %v1623 = vrot.slane %v1605, 4
      %v1624 = vsel %vm775, %v1623, %v1622
      %v1625 = vrot.slane %v1606, 3
      %v1626 = vsel %vm778, %v1625, %v1624
      %v1627 = vrot.slane %v1607, 2
      %v1628 = vsel %vm781, %v1627, %v1626
      %v1629 = vrot.slane %v1608, 1
      %v1630 = vsel %vm784, %v1629, %v1628
      %1632 = vadd.xlane.f32.xlu0 %v1630
      %v1633 = vpop.xlane.xlu0 %1632
      %v1634 = vmul.f32 %v1633, %v439
      %v1635 = vadd.f32 %v1634, 1e-12
      %v1636 = vrsqrt.pop %v1635
      %v1638 = vrot.slane %v1636, 1
      %v1639 = vrot.slane %v1636, 2
      %v1640 = vrot.slane %v1636, 3
      %v1641 = vrot.slane %v1636, 4
      %v1642 = vrot.slane %v1636, 5
      %v1643 = vrot.slane %v1636, 6
      %v1644 = vrot.slane %v1636, 7
      %v1653 = vmul.f32 %v1593, %v1636
      %v1654 = vmul.f32 %v1594, %v1638
      %v1655 = vmul.f32 %v1595, %v1639
      %v1656 = vmul.f32 %v1596, %v1640
      %v1657 = vmul.f32 %v1597, %v1641
      %v1658 = vmul.f32 %v1598, %v1642
      %v1659 = vmul.f32 %v1599, %v1643
      %v1660 = vmul.f32 %v1600, %v1644
      %v1661 = vlaneseq
      %v1662 = vshrl.u32 %v1661, 7
      %v1663 = vsub.s32 2, %v1662
      %v1664 = vrot.slane %v405, %v1663
      %v1665 = vmul.f32 %v1653, %v1664
      %v1666 = vmul.f32 %v1654, %v1664
      %v1667 = vmul.f32 %v1655, %v1664
      %v1668 = vmul.f32 %v1656, %v1664
      %v1669 = vmul.f32 %v1657, %v1664
      %v1670 = vmul.f32 %v1658, %v1664
      %v1671 = vmul.f32 %v1659, %v1664
      %v1672 = vmul.f32 %v1660, %v1664
      %v1673 = vlaneseq
      %v1674 = vshrl.u32 %v1673, 7
      %v1675 = vsub.s32 3, %v1674
      %v1676 = vrot.slane %v405, %v1675
      %v1677 = vadd.f32 %v1665, %v1676
      %v1678 = vadd.f32 %v1666, %v1676
      %v1679 = vadd.f32 %v1667, %v1676
      %v1680 = vadd.f32 %v1668, %v1676
      %v1681 = vadd.f32 %v1669, %v1676
      %v1682 = vadd.f32 %v1670, %v1676
      %v1683 = vadd.f32 %v1671, %v1676
      %v1684 = vadd.f32 %v1672, %v1676
      %v1685 = vpack.c.bf16 %v1677, %v1677
      %v1686 = vpack.c.bf16 %v1678, %v1678
      %v1687 = vpack.c.bf16 %v1679, %v1679
      %v1688 = vpack.c.bf16 %v1680, %v1680
      %v1689 = vpack.c.bf16 %v1681, %v1681
      %v1690 = vpack.c.bf16 %v1682, %v1682
      %v1691 = vpack.c.bf16 %v1683, %v1683
      %v1692 = vpack.c.bf16 %v1684, %v1684
      %v1693 = vld [vmem:[%s8] sm:$0xff]
      %v1694 = vld [vmem:[%s8 + $0x8] sm:$0xff]
      %v1695 = vld [vmem:[%s8 + $0x10] sm:$0xff]
      %v1696 = vld [vmem:[%s8 + $0x18] sm:$0xff]
      %v1697 = vld [vmem:[%s8 + $0x20] sm:$0xff]
      %v1698 = vld [vmem:[%s8 + $0x28] sm:$0xff]
      %v1699 = vld [vmem:[%s8 + $0x30] sm:$0xff]
      %v1700 = vld [vmem:[%s8 + $0x38] sm:$0xff]
      %v1701 = vld [vmem:[%s8 + $0x40] sm:$0xff]
      %v1702 = vld [vmem:[%s8 + $0x48] sm:$0xff]
      %v1703 = vld [vmem:[%s8 + $0x50] sm:$0xff]
      %v1704 = vld [vmem:[%s8 + $0x58] sm:$0xff]
      %v1705 = vld [vmem:[%s8 + $0x60] sm:$0xff]
      %v1706 = vld [vmem:[%s8 + $0x68] sm:$0xff]
      %v1707 = vld [vmem:[%s8 + $0x70] sm:$0xff]
      %v1708 = vld [vmem:[%s8 + $0x78] sm:$0xff]
      %v1709 = vld [vmem:[%s9] sm:$0x3]
      %v1711 = vlaneseq
      %v1712 = vshrl.u32 %v1711, 7
      %v1713 = vsub.s32 0, %v1712
      %v1714 = vrot.slane %v1709, %v1713
      %v1715 = vlaneseq
      %v1716 = vshrl.u32 %v1715, 7
      %v1717 = vsub.s32 1, %v1716
      %v1718 = vrot.slane %v1709, %v1717
      %v1729 = vunpack.c.l.b16 %v1685
      %v1730 = vunpack.c.l.b16 %v1686
      %v1731 = vunpack.c.l.b16 %v1687
      %v1732 = vunpack.c.l.b16 %v1688
      %v1733 = vunpack.c.l.b16 %v1689
      %v1734 = vunpack.c.l.b16 %v1690
      %v1735 = vunpack.c.l.b16 %v1691
      %v1736 = vunpack.c.l.b16 %v1692
      %v1737 = vrot.slane %v1730, 7
      %v1738 = vsel %vm766, %v1737, %v1729
      %v1739 = vrot.slane %v1731, 6
      %v1740 = vsel %vm769, %v1739, %v1738
      %v1741 = vrot.slane %v1732, 5
      %v1742 = vsel %vm772, %v1741, %v1740
      %v1743 = vrot.slane %v1733, 4
      %v1744 = vsel %vm775, %v1743, %v1742
      %v1745 = vrot.slane %v1734, 3
      %v1746 = vsel %vm778, %v1745, %v1744
      %v1747 = vrot.slane %v1735, 2
      %v1748 = vsel %vm781, %v1747, %v1746
      %v1749 = vrot.slane %v1736, 1
      %v1750 = vsel %vm784, %v1749, %v1748
      %v1751 = vpack.c.b16 %v1750, %v1750
      %v1769 = vunpack.c.l.b16 %v1693
      %v1770 = vunpack.c.h.b16 %v1693
      %v1771 = vunpack.c.l.b16 %v1694
      %v1772 = vunpack.c.h.b16 %v1694
      %v1773 = vunpack.c.l.b16 %v1695
      %v1774 = vunpack.c.h.b16 %v1695
      %v1775 = vunpack.c.l.b16 %v1696
      %v1776 = vunpack.c.h.b16 %v1696
      %v1777 = vunpack.c.l.b16 %v1697
      %v1778 = vunpack.c.h.b16 %v1697
      %v1779 = vunpack.c.l.b16 %v1698
      %v1780 = vunpack.c.h.b16 %v1698
      %v1781 = vunpack.c.l.b16 %v1699
      %v1782 = vunpack.c.h.b16 %v1699
      %v1783 = vunpack.c.l.b16 %v1700
      %v1784 = vunpack.c.h.b16 %v1700
      %v1785 = vunpack.c.l.b16 %v1701
      %v1786 = vunpack.c.h.b16 %v1701
      %v1787 = vunpack.c.l.b16 %v1702
      %v1788 = vunpack.c.h.b16 %v1702
      %v1789 = vunpack.c.l.b16 %v1703
      %v1790 = vunpack.c.h.b16 %v1703
      %v1791 = vunpack.c.l.b16 %v1704
      %v1792 = vunpack.c.h.b16 %v1704
      %v1793 = vunpack.c.l.b16 %v1705
      %v1794 = vunpack.c.h.b16 %v1705
      %v1795 = vunpack.c.l.b16 %v1706
      %v1796 = vunpack.c.h.b16 %v1706
      %v1797 = vunpack.c.l.b16 %v1707
      %v1798 = vunpack.c.h.b16 %v1707
      %v1799 = vunpack.c.l.b16 %v1708
      %v1800 = vunpack.c.h.b16 %v1708
      %v1801 = vpack.c.b16 %v1771, %v1769
      %v1802 = vpack.c.b16 %v1772, %v1770
      %v1803 = vpack.c.b16 %v1775, %v1773
      %v1804 = vpack.c.b16 %v1776, %v1774
      %v1805 = vpack.c.b16 %v1779, %v1777
      %v1806 = vpack.c.b16 %v1780, %v1778
      %v1807 = vpack.c.b16 %v1783, %v1781
      %v1808 = vpack.c.b16 %v1784, %v1782
      %v1809 = vpack.c.b16 %v1787, %v1785
      %v1810 = vpack.c.b16 %v1788, %v1786
      %v1811 = vpack.c.b16 %v1791, %v1789
      %v1812 = vpack.c.b16 %v1792, %v1790
      %v1813 = vpack.c.b16 %v1795, %v1793
      %v1814 = vpack.c.b16 %v1796, %v1794
      %v1815 = vpack.c.b16 %v1799, %v1797
      %v1816 = vpack.c.b16 %v1800, %v1798
      %1833 = vmatprep.subr.bf16.mxu0 %v1802
      %1834 = vmatpush1.bf16.msra.mxu0 %v1801
      %1835 = vmatprep.subr.bf16.mxu0 %v1804
      %1836 = vmatpush1.bf16.msra.mxu0 %v1803
      %1837 = vmatprep.subr.bf16.mxu0 %v1806
      %1838 = vmatpush1.bf16.msra.mxu0 %v1805
      %1839 = vmatprep.subr.bf16.mxu0 %v1808
      %1840 = vmatpush1.bf16.msra.mxu0 %v1807
      %1841 = vmatprep.subr.bf16.mxu0 %v1810
      %1842 = vmatpush1.bf16.msra.mxu0 %v1809
      %1843 = vmatprep.subr.bf16.mxu0 %v1812
      %1844 = vmatpush1.bf16.msra.mxu0 %v1811
      %1845 = vmatprep.subr.bf16.mxu0 %v1814
      %1846 = vmatpush1.bf16.msra.mxu0 %v1813
      %1847 = vmatprep.subr.bf16.mxu0 %v1816
      %1848 = vmatpush1.bf16.msra.mxu0 %v1815
      %1849 = vmatprep.subr.bf16.mxu0 0
      %1850 = vmatpush1.bf16.msra.mxu0 0
      %1851 = vmatprep.subr.bf16.mxu0 0
      %1852 = vmatpush1.bf16.msra.mxu0 0
      %1853 = vmatprep.subr.bf16.mxu0 0
      %1854 = vmatpush1.bf16.msra.mxu0 0
      %1855 = vmatprep.subr.bf16.mxu0 0
      %1856 = vmatpush1.bf16.msra.mxu0 0
      %1857 = vmatprep.subr.bf16.mxu0 0
      %1858 = vmatpush1.bf16.msra.mxu0 0
      %1859 = vmatprep.subr.bf16.mxu0 0
      %1860 = vmatpush1.bf16.msra.mxu0 0
      %1861 = vmatprep.subr.bf16.mxu0 0
      %1862 = vmatpush1.bf16.msra.mxu0 0
      %1863 = vmatprep.subr.bf16.mxu0 0
      %1864 = vmatpush1.bf16.msra.mxu0 0
      %1865 = vmatprep.mubr.bf16.mxu0 0
      %1866 = vmatmul.mubr.bf16.gmra.mrb[0].mxu0 %v1751
      %v1867 = vpop.f32.mrb[0].mxu0
      %v1868 = vadd.f32 %v1714, %v1867
      %v1869 = vpop.f32.mrb[0].mxu0
      %v1870 = vadd.f32 %v1718, %v1869
      %v1871 = vpop.f32.mrb[0].mxu0
      %v1872 = vpop.f32.mrb[0].mxu0
      %1873 = vdwg.mxu0
      %v1874 = vmul.f32 %v1868, %v1868
      %v1875 = vmul.f32 %v1870, %v1870
      %v1876 = vmul.f32 %v1868, %v1874
      %v1877 = vmul.f32 %v1870, %v1875
      %v1878 = vmul.f32 %v1876, 0.044715
      %v1879 = vmul.f32 %v1877, 0.044715
      %v1880 = vadd.f32 %v1868, %v1878
      %v1881 = vadd.f32 %v1870, %v1879
      %v1882 = vmul.f32 %v1880, 0.7978846
      %v1883 = vmul.f32 %v1881, 0.7978846
      %v1884 = vtanh.pop %v1882
      %v1885 = vtanh.pop %v1883
      %v1886 = vadd.f32 %v1884, 1.0
      %v1887 = vadd.f32 %v1885, 1.0
      %v1888 = vmul.f32 %v1886, 0.5
      %v1889 = vmul.f32 %v1887, 0.5
      %v1890 = vmul.f32 %v1868, %v1888
      %v1891 = vmul.f32 %v1870, %v1889
      %v1892 = vpack.c.bf16 %v1890, %v1890
      %v1893 = vpack.c.bf16 %v1891, %v1891
      %v1894 = vld [vmem:[%s10] sm:$0xf]
      %v1895 = vld [vmem:[%s10 + $0x4] sm:$0xf]
      %v1896 = vld [vmem:[%s10 + $0x8] sm:$0xf]
      %v1897 = vld [vmem:[%s10 + $0xc] sm:$0xf]
      %v1898 = vld [vmem:[%s10 + $0x10] sm:$0xf]
      %v1899 = vld [vmem:[%s10 + $0x14] sm:$0xf]
      %v1900 = vld [vmem:[%s10 + $0x18] sm:$0xf]
      %v1901 = vld [vmem:[%s10 + $0x1c] sm:$0xf]
      %v1902 = vld [vmem:[%s10 + $0x20] sm:$0xf]
      %v1903 = vld [vmem:[%s10 + $0x24] sm:$0xf]
      %v1904 = vld [vmem:[%s10 + $0x28] sm:$0xf]
      %v1905 = vld [vmem:[%s10 + $0x2c] sm:$0xf]
      %v1906 = vld [vmem:[%s10 + $0x30] sm:$0xf]
      %v1907 = vld [vmem:[%s10 + $0x34] sm:$0xf]
      %v1908 = vld [vmem:[%s10 + $0x38] sm:$0xf]
      %v1909 = vld [vmem:[%s10 + $0x3c] sm:$0xf]
      %v1910 = vld [vmem:[%s10 + $0x40] sm:$0xf]
      %v1911 = vld [vmem:[%s10 + $0x44] sm:$0xf]
      %v1912 = vld [vmem:[%s10 + $0x48] sm:$0xf]
      %v1913 = vld [vmem:[%s10 + $0x4c] sm:$0xf]
      %v1914 = vld [vmem:[%s10 + $0x50] sm:$0xf]
      %v1915 = vld [vmem:[%s10 + $0x54] sm:$0xf]
      %v1916 = vld [vmem:[%s10 + $0x58] sm:$0xf]
      %v1917 = vld [vmem:[%s10 + $0x5c] sm:$0xf]
      %v1918 = vld [vmem:[%s10 + $0x60] sm:$0xf]
      %v1919 = vld [vmem:[%s10 + $0x64] sm:$0xf]
      %v1920 = vld [vmem:[%s10 + $0x68] sm:$0xf]
      %v1921 = vld [vmem:[%s10 + $0x6c] sm:$0xf]
      %v1922 = vld [vmem:[%s10 + $0x70] sm:$0xf]
      %v1923 = vld [vmem:[%s10 + $0x74] sm:$0xf]
      %v1924 = vld [vmem:[%s10 + $0x78] sm:$0xf]
      %v1925 = vld [vmem:[%s10 + $0x7c] sm:$0xf]
      %v1926 = vlaneseq
      %v1927 = vshrl.u32 %v1926, 7
      %v1928 = vsub.s32 2, %v1927
      %v1929 = vrot.slane %v406, %v1928
      %v1962 = vunpack.c.l.b16 %v1894
      %v1963 = vunpack.c.l.b16 %v1895
      %v1964 = vunpack.c.l.b16 %v1896
      %v1965 = vunpack.c.l.b16 %v1897
      %v1966 = vunpack.c.l.b16 %v1898
      %v1967 = vunpack.c.l.b16 %v1899
      %v1968 = vunpack.c.l.b16 %v1900
      %v1969 = vunpack.c.l.b16 %v1901
      %v1970 = vunpack.c.l.b16 %v1902
      %v1971 = vunpack.c.l.b16 %v1903
      %v1972 = vunpack.c.l.b16 %v1904
      %v1973 = vunpack.c.l.b16 %v1905
      %v1974 = vunpack.c.l.b16 %v1906
      %v1975 = vunpack.c.l.b16 %v1907
      %v1976 = vunpack.c.l.b16 %v1908
      %v1977 = vunpack.c.l.b16 %v1909
      %v1978 = vunpack.c.l.b16 %v1910
      %v1979 = vunpack.c.l.b16 %v1911
      %v1980 = vunpack.c.l.b16 %v1912
      %v1981 = vunpack.c.l.b16 %v1913
      %v1982 = vunpack.c.l.b16 %v1914
      %v1983 = vunpack.c.l.b16 %v1915
      %v1984 = vunpack.c.l.b16 %v1916
      %v1985 = vunpack.c.l.b16 %v1917
      %v1986 = vunpack.c.l.b16 %v1918
      %v1987 = vunpack.c.l.b16 %v1919
      %v1988 = vunpack.c.l.b16 %v1920
      %v1989 = vunpack.c.l.b16 %v1921
      %v1990 = vunpack.c.l.b16 %v1922
      %v1991 = vunpack.c.l.b16 %v1923
      %v1992 = vunpack.c.l.b16 %v1924
      %v1993 = vunpack.c.l.b16 %v1925
      %v1994 = vpack.c.b16 %v1963, %v1962
      %v1995 = vpack.c.b16 %v1965, %v1964
      %v1996 = vpack.c.b16 %v1967, %v1966
      %v1997 = vpack.c.b16 %v1969, %v1968
      %v1998 = vpack.c.b16 %v1971, %v1970
      %v1999 = vpack.c.b16 %v1973, %v1972
      %v2000 = vpack.c.b16 %v1975, %v1974
      %v2001 = vpack.c.b16 %v1977, %v1976
      %v2002 = vpack.c.b16 %v1979, %v1978
      %v2003 = vpack.c.b16 %v1981, %v1980
      %v2004 = vpack.c.b16 %v1983, %v1982
      %v2005 = vpack.c.b16 %v1985, %v1984
      %v2006 = vpack.c.b16 %v1987, %v1986
      %v2007 = vpack.c.b16 %v1989, %v1988
      %v2008 = vpack.c.b16 %v1991, %v1990
      %v2009 = vpack.c.b16 %v1993, %v1992
      %2026 = vmatprep.subr.bf16.mxu0 0
      %2027 = vmatpush1.bf16.msra.mxu0 %v1994
      %2028 = vmatprep.subr.bf16.mxu0 0
      %2029 = vmatpush1.bf16.msra.mxu0 %v1995
      %2030 = vmatprep.subr.bf16.mxu0 0
      %2031 = vmatpush1.bf16.msra.mxu0 %v1996
      %2032 = vmatprep.subr.bf16.mxu0 0
      %2033 = vmatpush1.bf16.msra.mxu0 %v1997
      %2034 = vmatprep.subr.bf16.mxu0 0
      %2035 = vmatpush1.bf16.msra.mxu0 %v1998
      %2036 = vmatprep.subr.bf16.mxu0 0
      %2037 = vmatpush1.bf16.msra.mxu0 %v1999
      %2038 = vmatprep.subr.bf16.mxu0 0
      %2039 = vmatpush1.bf16.msra.mxu0 %v2000
      %2040 = vmatprep.subr.bf16.mxu0 0
      %2041 = vmatpush1.bf16.msra.mxu0 %v2001
      %2042 = vmatprep.subr.bf16.mxu0 0
      %2043 = vmatpush1.bf16.msra.mxu0 %v2002
      %2044 = vmatprep.subr.bf16.mxu0 0
      %2045 = vmatpush1.bf16.msra.mxu0 %v2003
      %2046 = vmatprep.subr.bf16.mxu0 0
      %2047 = vmatpush1.bf16.msra.mxu0 %v2004
      %2048 = vmatprep.subr.bf16.mxu0 0
      %2049 = vmatpush1.bf16.msra.mxu0 %v2005
      %2050 = vmatprep.subr.bf16.mxu0 0
      %2051 = vmatpush1.bf16.msra.mxu0 %v2006
      %2052 = vmatprep.subr.bf16.mxu0 0
      %2053 = vmatpush1.bf16.msra.mxu0 %v2007
      %2054 = vmatprep.subr.bf16.mxu0 0
      %2055 = vmatpush1.bf16.msra.mxu0 %v2008
      %2056 = vmatprep.subr.bf16.mxu0 0
      %2057 = vmatpush1.bf16.msra.mxu0 %v2009
      %2058 = vmatprep.mubr.bf16.mxu0 %v1893
      %2059 = vmatmul.mubr.bf16.gmra.mrb[0].mxu0 %v1892
      %v2060 = vpop.f32.mrb[0].mxu0
      %v2061 = vadd.f32 %v1929, %v2060
      %v2062 = vpop.f32.mrb[0].mxu0
      %v2063 = vpop.f32.mrb[0].mxu0
      %v2064 = vpop.f32.mrb[0].mxu0
      %2065 = vdwg.mxu0
      %v2067 = vrot.slane %v2061, 1
      %v2068 = vrot.slane %v2061, 2
      %v2069 = vrot.slane %v2061, 3
      %v2070 = vrot.slane %v2061, 4
      %v2071 = vrot.slane %v2061, 5
      %v2072 = vrot.slane %v2061, 6
      %v2073 = vrot.slane %v2061, 7
      %v2082 = vadd.f32 %v1677, %v2061
      %v2083 = vadd.f32 %v1678, %v2067
      %v2084 = vadd.f32 %v1679, %v2068
      %v2085 = vadd.f32 %v1680, %v2069
      %v2086 = vadd.f32 %v1681, %v2070
      %v2087 = vadd.f32 %v1682, %v2071
      %v2088 = vadd.f32 %v1683, %v2072
      %v2089 = vadd.f32 %v1684, %v2073
      %v2098 = vrot.slane %v2083, 7
      %v2099 = vsel %vm766, %v2098, %v2082
      %v2100 = vrot.slane %v2084, 6
      %v2101 = vsel %vm769, %v2100, %v2099
      %v2102 = vrot.slane %v2085, 5
      %v2103 = vsel %vm772, %v2102, %v2101
      %v2104 = vrot.slane %v2086, 4
      %v2105 = vsel %vm775, %v2104, %v2103
      %v2106 = vrot.slane %v2087, 3
      %v2107 = vsel %vm778, %v2106, %v2105
      %v2108 = vrot.slane %v2088, 2
      %v2109 = vsel %vm781, %v2108, %v2107
      %v2110 = vrot.slane %v2089, 1
      %v2111 = vsel %vm784, %v2110, %v2109
      %2113 = vadd.xlane.f32.xlu0 %v2111
      %v2114 = vpop.xlane.xlu0 %2113
      %v2115 = vmul.f32 %v2114, %v439
      %v2117 = vrot.slane %v2115, 1
      %v2118 = vrot.slane %v2115, 2
      %v2119 = vrot.slane %v2115, 3
      %v2120 = vrot.slane %v2115, 4
      %v2121 = vrot.slane %v2115, 5
      %v2122 = vrot.slane %v2115, 6
      %v2123 = vrot.slane %v2115, 7
      %v2132 = vsub.f32 %v2082, %v2115
      %v2133 = vsub.f32 %v2083, %v2117
      %v2134 = vsub.f32 %v2084, %v2118
      %v2135 = vsub.f32 %v2085, %v2119
      %v2136 = vsub.f32 %v2086, %v2120
      %v2137 = vsub.f32 %v2087, %v2121
      %v2138 = vsub.f32 %v2088, %v2122
      %v2139 = vsub.f32 %v2089, %v2123
      %v2140 = vmul.f32 %v2132, %v2132
      %v2141 = vmul.f32 %v2133, %v2133
      %v2142 = vmul.f32 %v2134, %v2134
      %v2143 = vmul.f32 %v2135, %v2135
      %v2144 = vmul.f32 %v2136, %v2136
      %v2145 = vmul.f32 %v2137, %v2137
      %v2146 = vmul.f32 %v2138, %v2138
      %v2147 = vmul.f32 %v2139, %v2139
      %v2156 = vrot.slane %v2141, 7
      %v2157 = vsel %vm766, %v2156, %v2140
      %v2158 = vrot.slane %v2142, 6
      %v2159 = vsel %vm769, %v2158, %v2157
      %v2160 = vrot.slane %v2143, 5
      %v2161 = vsel %vm772, %v2160, %v2159
      %v2162 = vrot.slane %v2144, 4
      %v2163 = vsel %vm775, %v2162, %v2161
      %v2164 = vrot.slane %v2145, 3
      %v2165 = vsel %vm778, %v2164, %v2163
      %v2166 = vrot.slane %v2146, 2
      %v2167 = vsel %vm781, %v2166, %v2165
      %v2168 = vrot.slane %v2147, 1
      %v2169 = vsel %vm784, %v2168, %v2167
      %2171 = vadd.xlane.f32.xlu0 %v2169
      %v2172 = vpop.xlane.xlu0 %2171
      %v2173 = vmul.f32 %v2172, %v439
      %v2174 = vadd.f32 %v2173, 1e-12
      %v2175 = vrsqrt.pop %v2174
      %v2177 = vrot.slane %v2175, 1
      %v2178 = vrot.slane %v2175, 2
      %v2179 = vrot.slane %v2175, 3
      %v2180 = vrot.slane %v2175, 4
      %v2181 = vrot.slane %v2175, 5
      %v2182 = vrot.slane %v2175, 6
      %v2183 = vrot.slane %v2175, 7
      %v2192 = vmul.f32 %v2132, %v2175
      %v2193 = vmul.f32 %v2133, %v2177
      %v2194 = vmul.f32 %v2134, %v2178
      %v2195 = vmul.f32 %v2135, %v2179
      %v2196 = vmul.f32 %v2136, %v2180
      %v2197 = vmul.f32 %v2137, %v2181
      %v2198 = vmul.f32 %v2138, %v2182
      %v2199 = vmul.f32 %v2139, %v2183
      %v2200 = vlaneseq
      %v2201 = vshrl.u32 %v2200, 7
      %v2202 = vsub.s32 4, %v2201
      %v2203 = vrot.slane %v405, %v2202
      %v2204 = vmul.f32 %v2192, %v2203
      %v2205 = vmul.f32 %v2193, %v2203
      %v2206 = vmul.f32 %v2194, %v2203
      %v2207 = vmul.f32 %v2195, %v2203
      %v2208 = vmul.f32 %v2196, %v2203
      %v2209 = vmul.f32 %v2197, %v2203
      %v2210 = vmul.f32 %v2198, %v2203
      %v2211 = vmul.f32 %v2199, %v2203
      %v2212 = vlaneseq
      %v2213 = vshrl.u32 %v2212, 7
      %v2214 = vsub.s32 5, %v2213
      %v2215 = vrot.slane %v405, %v2214
      %v2216 = vadd.f32 %v2204, %v2215
      %v2217 = vadd.f32 %v2205, %v2215
      %v2218 = vadd.f32 %v2206, %v2215
      %v2219 = vadd.f32 %v2207, %v2215
      %v2220 = vadd.f32 %v2208, %v2215
      %v2221 = vadd.f32 %v2209, %v2215
      %v2222 = vadd.f32 %v2210, %v2215
      %v2223 = vadd.f32 %v2211, %v2215
      %v2232 = vrot.slane %v2217, 7
      %v2233 = vsel %vm766, %v2232, %v2216
      %v2234 = vrot.slane %v2218, 6
      %v2235 = vsel %vm769, %v2234, %v2233
      %v2236 = vrot.slane %v2219, 5
      %v2237 = vsel %vm772, %v2236, %v2235
      %v2238 = vrot.slane %v2220, 4
      %v2239 = vsel %vm775, %v2238, %v2237
      %v2240 = vrot.slane %v2221, 3
      %v2241 = vsel %vm778, %v2240, %v2239
      %v2242 = vrot.slane %v2222, 2
      %v2243 = vsel %vm781, %v2242, %v2241
      %v2244 = vrot.slane %v2223, 1
      %v2245 = vsel %vm784, %v2244, %v2243
      %2247 = vst [vmem:[%s403] sm:$0xff] %v2245
      %p2248 = scmp.lt.s32.totalorder %s22, 1
      %s2249 = scalar_select %p2248, %s22, 1
      %s2250 = smul.addr %s2249, 8
      %s2251 = scalar_lea.vmem %s11, %s2250
      // Predicated region
      $region65: #{matchsum_forward.1} parent=63 // pred_check
        %p2252 = pneg %p281
      $region66: #{matchsum_forward.1} parent=63 // pred_check_branch
        %2254 = sbr.rel (%p2252) target = $region68
      $region67: #{matchsum_forward.1} parent=63 // pred_region
        _
      $region68: #{matchsum_forward.1} parent=63 // pred_fallthru
        _
    $region64: #{matchsum_forward.1} parent=5 // pred_fallthru
      _
    %p2255 = scmp.le.s32.totalorder 2, %s17
    // Predicated region
    $region69: #{matchsum_forward.1} parent=5 // pred_check
      %p2256 = pneg %p2255
    $region70: #{matchsum_forward.1} parent=5 // pred_check_branch
      %2258 = sbr.rel (%p2256) target = $region72
    $region71: #{matchsum_forward.1} parent=5 // pred_region
      %s2259 = ssub.s32 %s17, 2
      // Predicated region
      $region73: #{matchsum_forward.1} parent=71 // pred_check
        %p2260 = pneg %p287
      $region74: #{matchsum_forward.1} parent=71 // pred_check_branch
        %2262 = sbr.rel (%p2260) target = $region76
      $region75: #{matchsum_forward.1} parent=71 // pred_region
        %p2263 = scmp.lt.s32.totalorder %s23, 1
        %s2264 = scalar_select %p2263, %s23, 1
        %s2265 = smul.addr %s2264, 8
        %s2266 = scalar_lea.vmem %s11, %s2265
      $region76: #{matchsum_forward.1} parent=71 // pred_fallthru
        _
    $region72: #{matchsum_forward.1} parent=5 // pred_fallthru
      _
  $region6: #{matchsum_forward.1} parent=0 // loop_footer
    %s21 = sadd.s32 1, %s17
  $region7: #{matchsum_forward.1} parent=0 // loop_footer_branch
    %16 = sbr.rel target = $region3
  $region8: #{matchsum_forward.1} parent=0 // loop_exit
    _

</llo_original>
